<compile_context>
chip_gen: v7x
topology: tpu7x:2x2x1
jax: 0.10.0
libtpu: 0.0.40
codegen_flags: <defaults>
</compile_context>

<pallas_src>
import functools

import jax
import jax.numpy as jnp
from jax.experimental import pallas as pl
from jax.experimental.pallas import tpu as pltpu


HALO = 2  # max halo needed: 5-tap conv with padding=2


def _choose_tile_l(L, max_tl=512):
    """Pick a length tile: bounded VMEM, lane-aligned, evenly dividing L."""
    if L <= max_tl:
        return L
    for tl in range(max_tl, 127, -128):
        if tl % 128 == 0 and L % tl == 0:
            return tl
    # TODO(synk): support a ragged last tile; fall back to one full-L block.
    return L


def _build_halos(x_ncl, TL, nt):
    """(N, nt, in_c, 2*HALO): left 2 and right 2 columns of each tile (0 outside)."""
    x_pad = jnp.pad(x_ncl, ((0, 0), (0, 0), (HALO, HALO)))
    starts_l = jnp.arange(nt) * TL                    # padded coord of global (s - HALO)
    starts_r = starts_l + TL + HALO                   # padded coord of global (s + TL)
    idx = jnp.concatenate(
        [starts_l[:, None] + jnp.arange(HALO)[None, :],
         starts_r[:, None] + jnp.arange(HALO)[None, :]], axis=-1)   # (nt, 2*HALO)
    halos = x_pad[:, :, idx]                          # (N, in_c, nt, 2*HALO)
    return jnp.transpose(halos, (0, 2, 1, 3))         # (N, nt, in_c, 2*HALO)


def _inception_kernel(x_ref, halo_ref,
                      wh_ref, bh_ref,
                      w22_ref, b22_ref,
                      w32_ref, b32_ref,
                      w4_ref, b4_ref,
                      o_ref, *, c1, c2a, c2b, c3a, c3b, c4):
    li = pl.program_id(1)
    nt = pl.num_programs(1)
    f32 = jnp.float32

    x = x_ref[0].astype(f32)                 # (in_c, TL)   L on lanes
    halo = halo_ref[0, 0].astype(f32)        # (in_c, 2*HALO)
    TL = x.shape[1]

    # scalar {0,1} validity of the left / right halo columns of this tile
    l_valid = (li > 0).astype(f32)
    r_valid = (li < nt - 1).astype(f32)

    # ---- fused 1x1 heads: rows = [p1 | h2 | h3], one MXU matmul over x ----
    wh = wh_ref[...].astype(f32)             # (c1+c2a+c3a, in_c)
    bh = bh_ref[...].astype(f32)             # (c1+c2a+c3a, 1)
    head = jnp.maximum(jnp.dot(wh, x, preferred_element_type=f32) + bh, 0.0)
    hh = jnp.maximum(jnp.dot(wh, halo, preferred_element_type=f32) + bh, 0.0)
    # tap convs zero-pad their input, so out-of-range halo columns must be 0
    hh_l = hh[:, :HALO] * l_valid            # (CH, HALO)
    hh_r = hh[:, HALO:] * r_valid            # (CH, HALO)

    p1 = head[0:c1, :]
    h2 = head[c1:c1 + c2a, :]
    h3 = head[c1 + c2a:, :]

    # ---- branch 2: 3-tap conv (padding=1) on h2 ----
    h2_ext = jnp.concatenate(
        [hh_l[c1:c1 + c2a, HALO - 1:HALO], h2, hh_r[c1:c1 + c2a, 0:1]],
        axis=1)                              # (c2a, TL + 2)
    acc2 = jnp.dot(w22_ref[0].astype(f32), h2_ext[:, 0:TL],
                   preferred_element_type=f32)
    for t in range(1, 3):
        acc2 = acc2 + jnp.dot(w22_ref[t].astype(f32), h2_ext[:, t:t + TL],
                              preferred_element_type=f32)
    p2 = jnp.maximum(acc2 + b22_ref[...].astype(f32), 0.0)

    # ---- branch 3: 5-tap conv (padding=2) on h3 ----
    h3_ext = jnp.concatenate(
        [hh_l[c1 + c2a:, :], h3, hh_r[c1 + c2a:, :]], axis=1)   # (c3a, TL + 4)
    acc3 = jnp.dot(w32_ref[0].astype(f32), h3_ext[:, 0:TL],
                   preferred_element_type=f32)
    for t in range(1, 5):
        acc3 = acc3 + jnp.dot(w32_ref[t].astype(f32), h3_ext[:, t:t + TL],
                              preferred_element_type=f32)
    p3 = jnp.maximum(acc3 + b32_ref[...].astype(f32), 0.0)

    # ---- branch 4: maxpool(3, padding=1) then 1x1 conv ----
    # out-of-range neighbours behave like -inf; -3e38 is equivalent for finite f32
    NEG = jnp.float32(-3.0e38)
    xl = halo[:, HALO - 1:HALO] * l_valid + (1.0 - l_valid) * NEG   # (in_c, 1)
    xr = halo[:, HALO:HALO + 1] * r_valid + (1.0 - r_valid) * NEG   # (in_c, 1)
    x_ext = jnp.concatenate([xl, x, xr], axis=1)                    # (in_c, TL + 2)
    pooled = jnp.maximum(jnp.maximum(x_ext[:, 0:TL], x_ext[:, 1:TL + 1]),
                         x_ext[:, 2:TL + 2])
    p4 = jnp.maximum(
        jnp.dot(w4_ref[...].astype(f32), pooled, preferred_element_type=f32)
        + b4_ref[...].astype(f32), 0.0)

    # ---- direct slice stores into the lane-dense NCL output tile ----
    dt = o_ref.dtype
    o_ref[0, 0:c1, :] = p1.astype(dt)
    o_ref[0, c1:c1 + c2b, :] = p2.astype(dt)
    o_ref[0, c1 + c2b:c1 + c2b + c3b, :] = p3.astype(dt)
    o_ref[0, c1 + c2b + c3b:, :] = p4.astype(dt)


def inception_1d(x_ncl, params, tile_l=None):
    """x_ncl: (N, in_c, L) float32 -> (N, c1+c2[1]+c3[1]+c4, L) float32."""
    (w1, b1, w21, b21, w22, b22, w31, b31, w32, b32, w4, b4) = params
    N, in_c, L = x_ncl.shape
    c1, c2a, c2b = w1.shape[0], w21.shape[0], w22.shape[0]
    c3a, c3b, c4 = w31.shape[0], w32.shape[0], w4.shape[0]
    c_out = c1 + c2b + c3b + c4

    TL = _choose_tile_l(L) if tile_l is None else tile_l
    if L % TL != 0:
        raise ValueError(f"tile_l={TL} must divide L={L}")
    nt = L // TL

    # host-side weight prep: fuse the three 1x1 heads; tap weights as (k, Cout, Cin)
    wh = jnp.concatenate([w1, w21, w31], axis=0)              # (c1+c2a+c3a, in_c)
    bh = jnp.concatenate([b1, b21, b31], axis=0)[:, None]     # (c1+c2a+c3a, 1)
    w22k = jnp.transpose(w22, (2, 0, 1))                      # (3, c2b, c2a)
    w32k = jnp.transpose(w32, (2, 0, 1))                      # (5, c3b, c3a)
    b22c, b32c, b4c = b22[:, None], b32[:, None], b4[:, None]

    halos = _build_halos(x_ncl, TL, nt)                       # (N, nt, in_c, 2*HALO)

    kernel = functools.partial(_inception_kernel, c1=c1, c2a=c2a, c2b=c2b,
                               c3a=c3a, c3b=c3b, c4=c4)

    def full_spec(shape):
        nd = len(shape)
        return pl.BlockSpec(shape, lambda n, l, nd=nd: (0,) * nd)

    return pl.pallas_call(
        kernel,
        out_shape=jax.ShapeDtypeStruct((N, c_out, L), x_ncl.dtype),
        grid=(N, nt),
        in_specs=[
            pl.BlockSpec((1, in_c, TL), lambda n, l: (n, 0, l)),
            pl.BlockSpec((1, 1, in_c, 2 * HALO), lambda n, l: (n, l, 0, 0)),
            full_spec(wh.shape), full_spec(bh.shape),
            full_spec(w22k.shape), full_spec(b22c.shape),
            full_spec(w32k.shape), full_spec(b32c.shape),
            full_spec(w4.shape), full_spec(b4c.shape),
        ],
        out_specs=pl.BlockSpec((1, c_out, TL), lambda n, l: (n, 0, l)),
        compiler_params=pltpu.CompilerParams(
            dimension_semantics=("parallel", "parallel"),
            vmem_limit_bytes=32 * 1024 * 1024),
    )(x_ncl, halos, wh, bh, w22k, b22c, w32k, b32c, w4, b4c)


def make_params(key, in_c, c1, c2, c3, c4):
    """Deterministic synthetic parameters in PyTorch Conv1d layouts."""
    ks = jax.random.split(key, 12)
    scale = 0.1

    def w(k, shape):
        return scale * jax.random.normal(k, shape, dtype=jnp.float32)

    w1 = w(ks[0], (c1, in_c));           b1 = w(ks[1], (c1,))
    w21 = w(ks[2], (c2[0], in_c));       b21 = w(ks[3], (c2[0],))
    w22 = w(ks[4], (c2[1], c2[0], 3));   b22 = w(ks[5], (c2[1],))
    w31 = w(ks[6], (c3[0], in_c));       b31 = w(ks[7], (c3[0],))
    w32 = w(ks[8], (c3[1], c3[0], 5));   b32 = w(ks[9], (c3[1],))
    w4 = w(ks[10], (c4, in_c));          b4 = w(ks[11], (c4,))
    return (w1, b1, w21, b21, w22, b22, w31, b31, w32, b32, w4, b4)


def _reference(x_ncl, params):
    """Pure-JAX (lax.conv) reference matching PyTorch Conv1d/MaxPool1d semantics."""
    (w1, b1, w21, b21, w22, b22, w31, b31, w32, b32, w4, b4) = params

    def conv1d(x, w_oik, b, pad):
        y = jax.lax.conv_general_dilated(
            x, w_oik, window_strides=(1,), padding=[(pad, pad)],
            dimension_numbers=("NCH", "OIH", "NCH"))
        return y + b[None, :, None]

    def conv1x1(x, w_oi, b):
        return conv1d(x, w_oi[:, :, None], b, 0)

    relu = jax.nn.relu
    p1 = relu(conv1x1(x_ncl, w1, b1))
    p2 = relu(conv1d(relu(conv1x1(x_ncl, w21, b21)), w22, b22, 1))
    p3 = relu(conv1d(relu(conv1x1(x_ncl, w31, b31)), w32, b32, 2))
    pooled = jax.lax.reduce_window(
        x_ncl, -jnp.inf, jax.lax.max,
        window_dimensions=(1, 1, 3), window_strides=(1, 1, 1),
        padding=[(0, 0), (0, 0), (1, 1)])
    p4 = relu(conv1x1(pooled, w4, b4))
    return jnp.concatenate([p1, p2, p3, p4], axis=1)


if __name__ == "__main__":
    key = jax.random.PRNGKey(0)
    k_x, k_p, k_x2 = jax.random.split(key, 3)

    # Small shapes consistent with the module: X is (N, in_c, L).
    N, in_c, L = 2, 4, 16
    c1, c2, c3, c4 = 8, (4, 8), (4, 8), 8
    params = make_params(k_p, in_c, c1, c2, c3, c4)

    # single-tile path
    x = jax.random.normal(k_x, (N, in_c, L), dtype=jnp.float32)
    out = jax.block_until_ready(inception_1d(x, params))
    ref = _reference(x, params)
    assert out.shape == (N, c1 + c2[1] + c3[1] + c4, L), out.shape
    assert jnp.allclose(out, ref, atol=1e-4, rtol=1e-4), "mismatch (single tile)"

    # L-tiled path with halos: L=256 split into two 128-wide tiles
    L2 = 256
    x2 = jax.random.normal(k_x2, (N, in_c, L2), dtype=jnp.float32)
    out2 = jax.block_until_ready(inception_1d(x2, params, tile_l=128))
    ref2 = _reference(x2, params)
    assert out2.shape == (N, c1 + c2[1] + c3[1] + c4, L2), out2.shape
    assert jnp.allclose(out2, ref2, atol=1e-4, rtol=1e-4), "mismatch (tiled)"

    print("KERNEL_OK")
</pallas_src>

<mosaic_0001>
module attributes {stable_mosaic.version = 11 : i64} {
  func.func @_inception_kernel(%arg0: i32, %arg1: i32, %arg2: memref<1x4x16xf32, #tpu.memory_space<vmem>>, %arg3: memref<1x1x4x4xf32, #tpu.memory_space<vmem>>, %arg4: memref<16x4xf32, #tpu.memory_space<vmem>>, %arg5: memref<16x1xf32, #tpu.memory_space<vmem>>, %arg6: memref<3x8x4xf32, #tpu.memory_space<vmem>>, %arg7: memref<8x1xf32, #tpu.memory_space<vmem>>, %arg8: memref<5x8x4xf32, #tpu.memory_space<vmem>>, %arg9: memref<8x1xf32, #tpu.memory_space<vmem>>, %arg10: memref<8x4xf32, #tpu.memory_space<vmem>>, %arg11: memref<8x1xf32, #tpu.memory_space<vmem>>, %arg12: memref<1x32x16xf32, #tpu.memory_space<vmem>>) attributes {dimension_semantics = [#tpu.dimension_semantics<parallel>, #tpu.dimension_semantics<parallel>], iteration_bounds = array<i64: 2, 1>, scalar_prefetch = 0 : i64, scratch_operands = 0 : i64, tpu.core_type = #tpu.core_type<tc>, window_params = [{transform_indices = @transform_0, window_bounds = array<i64: 1, 4, 16>}, {transform_indices = @transform_1, window_bounds = array<i64: 1, 1, 4, 4>}, {pipeline_mode = #tpu.pipeline_mode<synchronous>, transform_indices = @transform_2, window_bounds = array<i64: 16, 4>}, {pipeline_mode = #tpu.pipeline_mode<synchronous>, transform_indices = @transform_3, window_bounds = array<i64: 16, 1>}, {pipeline_mode = #tpu.pipeline_mode<synchronous>, transform_indices = @transform_4, window_bounds = array<i64: 3, 8, 4>}, {pipeline_mode = #tpu.pipeline_mode<synchronous>, transform_indices = @transform_5, window_bounds = array<i64: 8, 1>}, {pipeline_mode = #tpu.pipeline_mode<synchronous>, transform_indices = @transform_6, window_bounds = array<i64: 5, 8, 4>}, {pipeline_mode = #tpu.pipeline_mode<synchronous>, transform_indices = @transform_7, window_bounds = array<i64: 8, 1>}, {pipeline_mode = #tpu.pipeline_mode<synchronous>, transform_indices = @transform_8, window_bounds = array<i64: 8, 4>}, {pipeline_mode = #tpu.pipeline_mode<synchronous>, transform_indices = @transform_9, window_bounds = array<i64: 8, 1>}, {transform_indices = @transform_10, window_bounds = array<i64: 1, 32, 16>}]} {
    %c0 = arith.constant 0 : index
    %c0_0 = arith.constant 0 : index
    %c0_1 = arith.constant 0 : index
    %0 = vector.load %arg2[%c0, %c0_0, %c0_1] : memref<1x4x16xf32, #tpu.memory_space<vmem>>, vector<1x4x16xf32>
    %1 = vector.shape_cast %0 : vector<1x4x16xf32> to vector<4x16xf32>
    %c0_2 = arith.constant 0 : index
    %c0_3 = arith.constant 0 : index
    %c0_4 = arith.constant 0 : index
    %c0_5 = arith.constant 0 : index
    %2 = vector.load %arg3[%c0_2, %c0_3, %c0_4, %c0_5] : memref<1x1x4x4xf32, #tpu.memory_space<vmem>>, vector<1x1x4x4xf32>
    %3 = vector.shape_cast %2 : vector<1x1x4x4xf32> to vector<4x4xf32>
    %c0_i32 = arith.constant 0 : i32
    %4 = arith.cmpi sgt, %arg1, %c0_i32 : i32
    %5 = arith.extui %4 : i1 to i32
    %6 = arith.sitofp %5 : i32 to f32
    %c0_i32_6 = arith.constant 0 : i32
    %7 = arith.cmpi slt, %arg1, %c0_i32_6 : i32
    %8 = arith.extui %7 : i1 to i32
    %9 = arith.sitofp %8 : i32 to f32
    %c0_7 = arith.constant 0 : index
    %c0_8 = arith.constant 0 : index
    %10 = vector.load %arg4[%c0_7, %c0_8] : memref<16x4xf32, #tpu.memory_space<vmem>>, vector<16x4xf32>
    %c0_9 = arith.constant 0 : index
    %c0_10 = arith.constant 0 : index
    %11 = vector.load %arg5[%c0_9, %c0_10] : memref<16x1xf32, #tpu.memory_space<vmem>>, vector<16x1xf32>
    %cst = arith.constant dense<0.000000e+00> : vector<16x16xf32>
    %12 = tpu.matmul %10, %1, %cst {dimension_numbers = #tpu.dot_dimension_numbers<[1], [0], [0], [1], [0, 0, 1, 1], [], []>} : vector<16x4xf32>, vector<4x16xf32>, vector<16x16xf32> -> vector<16x16xf32>
    %13 = vector.broadcast %11 : vector<16x1xf32> to vector<16x16xf32>
    %14 = arith.addf %12, %13 : vector<16x16xf32>
    %cst_11 = arith.constant 0.000000e+00 : f32
    %15 = vector.broadcast %cst_11 : f32 to vector<16x16xf32>
    %16 = arith.maximumf %14, %15 : vector<16x16xf32>
    %cst_12 = arith.constant dense<0.000000e+00> : vector<16x4xf32>
    %17 = tpu.matmul %10, %3, %cst_12 {dimension_numbers = #tpu.dot_dimension_numbers<[1], [0], [0], [1], [0, 0, 1, 1], [], []>} : vector<16x4xf32>, vector<4x4xf32>, vector<16x4xf32> -> vector<16x4xf32>
    %18 = vector.broadcast %11 : vector<16x1xf32> to vector<16x4xf32>
    %19 = arith.addf %17, %18 : vector<16x4xf32>
    %cst_13 = arith.constant 0.000000e+00 : f32
    %20 = vector.broadcast %cst_13 : f32 to vector<16x4xf32>
    %21 = arith.maximumf %19, %20 : vector<16x4xf32>
    %22 = vector.extract_strided_slice %21 {offsets = [0, 0], sizes = [16, 2], strides = [1, 1]} : vector<16x4xf32> to vector<16x2xf32>
    %23 = vector.broadcast %6 : f32 to vector<16x2xf32>
    %24 = arith.mulf %22, %23 : vector<16x2xf32>
    %25 = vector.extract_strided_slice %21 {offsets = [0, 2], sizes = [16, 2], strides = [1, 1]} : vector<16x4xf32> to vector<16x2xf32>
    %26 = vector.broadcast %9 : f32 to vector<16x2xf32>
    %27 = arith.mulf %25, %26 : vector<16x2xf32>
    %28 = vector.extract_strided_slice %16 {offsets = [0, 0], sizes = [8, 16], strides = [1, 1]} : vector<16x16xf32> to vector<8x16xf32>
    %29 = vector.extract_strided_slice %16 {offsets = [8, 0], sizes = [4, 16], strides = [1, 1]} : vector<16x16xf32> to vector<4x16xf32>
    %30 = vector.extract_strided_slice %16 {offsets = [12, 0], sizes = [4, 16], strides = [1, 1]} : vector<16x16xf32> to vector<4x16xf32>
    %31 = vector.extract_strided_slice %24 {offsets = [8, 1], sizes = [4, 1], strides = [1, 1]} : vector<16x2xf32> to vector<4x1xf32>
    %32 = vector.extract_strided_slice %27 {offsets = [8, 0], sizes = [4, 1], strides = [1, 1]} : vector<16x2xf32> to vector<4x1xf32>
    %33 = tpu.concatenate %31, %29, %32 in 1 : vector<4x1xf32>, vector<4x16xf32>, vector<4x1xf32> -> vector<4x18xf32>
    %c0_14 = arith.constant 0 : index
    %c0_15 = arith.constant 0 : index
    %c0_16 = arith.constant 0 : index
    %34 = vector.load %arg6[%c0_14, %c0_15, %c0_16] : memref<3x8x4xf32, #tpu.memory_space<vmem>>, vector<1x8x4xf32>
    %35 = vector.shape_cast %34 : vector<1x8x4xf32> to vector<8x4xf32>
    %36 = vector.extract_strided_slice %33 {offsets = [0, 0], sizes = [4, 16], strides = [1, 1]} : vector<4x18xf32> to vector<4x16xf32>
    %cst_17 = arith.constant dense<0.000000e+00> : vector<8x16xf32>
    %37 = tpu.matmul %35, %36, %cst_17 {dimension_numbers = #tpu.dot_dimension_numbers<[1], [0], [0], [1], [0, 0, 1, 1], [], []>} : vector<8x4xf32>, vector<4x16xf32>, vector<8x16xf32> -> vector<8x16xf32>
    %c1 = arith.constant 1 : index
    %c0_18 = arith.constant 0 : index
    %c0_19 = arith.constant 0 : index
    %38 = vector.load %arg6[%c1, %c0_18, %c0_19] : memref<3x8x4xf32, #tpu.memory_space<vmem>>, vector<1x8x4xf32>
    %39 = vector.shape_cast %38 : vector<1x8x4xf32> to vector<8x4xf32>
    %40 = vector.extract_strided_slice %33 {offsets = [0, 1], sizes = [4, 16], strides = [1, 1]} : vector<4x18xf32> to vector<4x16xf32>
    %cst_20 = arith.constant dense<0.000000e+00> : vector<8x16xf32>
    %41 = tpu.matmul %39, %40, %cst_20 {dimension_numbers = #tpu.dot_dimension_numbers<[1], [0], [0], [1], [0, 0, 1, 1], [], []>} : vector<8x4xf32>, vector<4x16xf32>, vector<8x16xf32> -> vector<8x16xf32>
    %42 = arith.addf %37, %41 : vector<8x16xf32>
    %c2 = arith.constant 2 : index
    %c0_21 = arith.constant 0 : index
    %c0_22 = arith.constant 0 : index
    %43 = vector.load %arg6[%c2, %c0_21, %c0_22] : memref<3x8x4xf32, #tpu.memory_space<vmem>>, vector<1x8x4xf32>
    %44 = vector.shape_cast %43 : vector<1x8x4xf32> to vector<8x4xf32>
    %45 = vector.extract_strided_slice %33 {offsets = [0, 2], sizes = [4, 16], strides = [1, 1]} : vector<4x18xf32> to vector<4x16xf32>
    %cst_23 = arith.constant dense<0.000000e+00> : vector<8x16xf32>
    %46 = tpu.matmul %44, %45, %cst_23 {dimension_numbers = #tpu.dot_dimension_numbers<[1], [0], [0], [1], [0, 0, 1, 1], [], []>} : vector<8x4xf32>, vector<4x16xf32>, vector<8x16xf32> -> vector<8x16xf32>
    %47 = arith.addf %42, %46 : vector<8x16xf32>
    %c0_24 = arith.constant 0 : index
    %c0_25 = arith.constant 0 : index
    %48 = vector.load %arg7[%c0_24, %c0_25] : memref<8x1xf32, #tpu.memory_space<vmem>>, vector<8x1xf32>
    %49 = vector.broadcast %48 : vector<8x1xf32> to vector<8x16xf32>
    %50 = arith.addf %47, %49 : vector<8x16xf32>
    %cst_26 = arith.constant 0.000000e+00 : f32
    %51 = vector.broadcast %cst_26 : f32 to vector<8x16xf32>
    %52 = arith.maximumf %50, %51 : vector<8x16xf32>
    %53 = vector.extract_strided_slice %24 {offsets = [12, 0], sizes = [4, 2], strides = [1, 1]} : vector<16x2xf32> to vector<4x2xf32>
    %54 = vector.extract_strided_slice %27 {offsets = [12, 0], sizes = [4, 2], strides = [1, 1]} : vector<16x2xf32> to vector<4x2xf32>
    %55 = tpu.concatenate %53, %30, %54 in 1 : vector<4x2xf32>, vector<4x16xf32>, vector<4x2xf32> -> vector<4x20xf32>
    %c0_27 = arith.constant 0 : index
    %c0_28 = arith.constant 0 : index
    %c0_29 = arith.constant 0 : index
    %56 = vector.load %arg8[%c0_27, %c0_28, %c0_29] : memref<5x8x4xf32, #tpu.memory_space<vmem>>, vector<1x8x4xf32>
    %57 = vector.shape_cast %56 : vector<1x8x4xf32> to vector<8x4xf32>
    %58 = vector.extract_strided_slice %55 {offsets = [0, 0], sizes = [4, 16], strides = [1, 1]} : vector<4x20xf32> to vector<4x16xf32>
    %cst_30 = arith.constant dense<0.000000e+00> : vector<8x16xf32>
    %59 = tpu.matmul %57, %58, %cst_30 {dimension_numbers = #tpu.dot_dimension_numbers<[1], [0], [0], [1], [0, 0, 1, 1], [], []>} : vector<8x4xf32>, vector<4x16xf32>, vector<8x16xf32> -> vector<8x16xf32>
    %c1_31 = arith.constant 1 : index
    %c0_32 = arith.constant 0 : index
    %c0_33 = arith.constant 0 : index
    %60 = vector.load %arg8[%c1_31, %c0_32, %c0_33] : memref<5x8x4xf32, #tpu.memory_space<vmem>>, vector<1x8x4xf32>
    %61 = vector.shape_cast %60 : vector<1x8x4xf32> to vector<8x4xf32>
    %62 = vector.extract_strided_slice %55 {offsets = [0, 1], sizes = [4, 16], strides = [1, 1]} : vector<4x20xf32> to vector<4x16xf32>
    %cst_34 = arith.constant dense<0.000000e+00> : vector<8x16xf32>
    %63 = tpu.matmul %61, %62, %cst_34 {dimension_numbers = #tpu.dot_dimension_numbers<[1], [0], [0], [1], [0, 0, 1, 1], [], []>} : vector<8x4xf32>, vector<4x16xf32>, vector<8x16xf32> -> vector<8x16xf32>
    %64 = arith.addf %59, %63 : vector<8x16xf32>
    %c2_35 = arith.constant 2 : index
    %c0_36 = arith.constant 0 : index
    %c0_37 = arith.constant 0 : index
    %65 = vector.load %arg8[%c2_35, %c0_36, %c0_37] : memref<5x8x4xf32, #tpu.memory_space<vmem>>, vector<1x8x4xf32>
    %66 = vector.shape_cast %65 : vector<1x8x4xf32> to vector<8x4xf32>
    %67 = vector.extract_strided_slice %55 {offsets = [0, 2], sizes = [4, 16], strides = [1, 1]} : vector<4x20xf32> to vector<4x16xf32>
    %cst_38 = arith.constant dense<0.000000e+00> : vector<8x16xf32>
    %68 = tpu.matmul %66, %67, %cst_38 {dimension_numbers = #tpu.dot_dimension_numbers<[1], [0], [0], [1], [0, 0, 1, 1], [], []>} : vector<8x4xf32>, vector<4x16xf32>, vector<8x16xf32> -> vector<8x16xf32>
    %69 = arith.addf %64, %68 : vector<8x16xf32>
    %c3 = arith.constant 3 : index
    %c0_39 = arith.constant 0 : index
    %c0_40 = arith.constant 0 : index
    %70 = vector.load %arg8[%c3, %c0_39, %c0_40] : memref<5x8x4xf32, #tpu.memory_space<vmem>>, vector<1x8x4xf32>
    %71 = vector.shape_cast %70 : vector<1x8x4xf32> to vector<8x4xf32>
    %72 = vector.extract_strided_slice %55 {offsets = [0, 3], sizes = [4, 16], strides = [1, 1]} : vector<4x20xf32> to vector<4x16xf32>
    %cst_41 = arith.constant dense<0.000000e+00> : vector<8x16xf32>
    %73 = tpu.matmul %71, %72, %cst_41 {dimension_numbers = #tpu.dot_dimension_numbers<[1], [0], [0], [1], [0, 0, 1, 1], [], []>} : vector<8x4xf32>, vector<4x16xf32>, vector<8x16xf32> -> vector<8x16xf32>
    %74 = arith.addf %69, %73 : vector<8x16xf32>
    %c4 = arith.constant 4 : index
    %c0_42 = arith.constant 0 : index
    %c0_43 = arith.constant 0 : index
    %75 = vector.load %arg8[%c4, %c0_42, %c0_43] : memref<5x8x4xf32, #tpu.memory_space<vmem>>, vector<1x8x4xf32>
    %76 = vector.shape_cast %75 : vector<1x8x4xf32> to vector<8x4xf32>
    %77 = vector.extract_strided_slice %55 {offsets = [0, 4], sizes = [4, 16], strides = [1, 1]} : vector<4x20xf32> to vector<4x16xf32>
    %cst_44 = arith.constant dense<0.000000e+00> : vector<8x16xf32>
    %78 = tpu.matmul %76, %77, %cst_44 {dimension_numbers = #tpu.dot_dimension_numbers<[1], [0], [0], [1], [0, 0, 1, 1], [], []>} : vector<8x4xf32>, vector<4x16xf32>, vector<8x16xf32> -> vector<8x16xf32>
    %79 = arith.addf %74, %78 : vector<8x16xf32>
    %c0_45 = arith.constant 0 : index
    %c0_46 = arith.constant 0 : index
    %80 = vector.load %arg9[%c0_45, %c0_46] : memref<8x1xf32, #tpu.memory_space<vmem>>, vector<8x1xf32>
    %81 = vector.broadcast %80 : vector<8x1xf32> to vector<8x16xf32>
    %82 = arith.addf %79, %81 : vector<8x16xf32>
    %cst_47 = arith.constant 0.000000e+00 : f32
    %83 = vector.broadcast %cst_47 : f32 to vector<8x16xf32>
    %84 = arith.maximumf %82, %83 : vector<8x16xf32>
    %85 = vector.extract_strided_slice %3 {offsets = [0, 1], sizes = [4, 1], strides = [1, 1]} : vector<4x4xf32> to vector<4x1xf32>
    %86 = vector.broadcast %6 : f32 to vector<4x1xf32>
    %87 = arith.mulf %85, %86 : vector<4x1xf32>
    %cst_48 = arith.constant 1.000000e+00 : f32
    %88 = arith.subf %cst_48, %6 : f32
    %cst_49 = arith.constant -3.000000e+38 : f32
    %89 = arith.mulf %88, %cst_49 : f32
    %90 = vector.broadcast %89 : f32 to vector<4x1xf32>
    %91 = arith.addf %87, %90 : vector<4x1xf32>
    %92 = vector.extract_strided_slice %3 {offsets = [0, 2], sizes = [4, 1], strides = [1, 1]} : vector<4x4xf32> to vector<4x1xf32>
    %93 = vector.broadcast %9 : f32 to vector<4x1xf32>
    %94 = arith.mulf %92, %93 : vector<4x1xf32>
    %cst_50 = arith.constant 1.000000e+00 : f32
    %95 = arith.subf %cst_50, %9 : f32
    %cst_51 = arith.constant -3.000000e+38 : f32
    %96 = arith.mulf %95, %cst_51 : f32
    %97 = vector.broadcast %96 : f32 to vector<4x1xf32>
    %98 = arith.addf %94, %97 : vector<4x1xf32>
    %99 = tpu.concatenate %91, %1, %98 in 1 : vector<4x1xf32>, vector<4x16xf32>, vector<4x1xf32> -> vector<4x18xf32>
    %100 = vector.extract_strided_slice %99 {offsets = [0, 0], sizes = [4, 16], strides = [1, 1]} : vector<4x18xf32> to vector<4x16xf32>
    %101 = vector.extract_strided_slice %99 {offsets = [0, 1], sizes = [4, 16], strides = [1, 1]} : vector<4x18xf32> to vector<4x16xf32>
    %102 = arith.maximumf %100, %101 : vector<4x16xf32>
    %103 = vector.extract_strided_slice %99 {offsets = [0, 2], sizes = [4, 16], strides = [1, 1]} : vector<4x18xf32> to vector<4x16xf32>
    %104 = arith.maximumf %102, %103 : vector<4x16xf32>
    %c0_52 = arith.constant 0 : index
    %c0_53 = arith.constant 0 : index
    %105 = vector.load %arg10[%c0_52, %c0_53] : memref<8x4xf32, #tpu.memory_space<vmem>>, vector<8x4xf32>
    %cst_54 = arith.constant dense<0.000000e+00> : vector<8x16xf32>
    %106 = tpu.matmul %105, %104, %cst_54 {dimension_numbers = #tpu.dot_dimension_numbers<[1], [0], [0], [1], [0, 0, 1, 1], [], []>} : vector<8x4xf32>, vector<4x16xf32>, vector<8x16xf32> -> vector<8x16xf32>
    %c0_55 = arith.constant 0 : index
    %c0_56 = arith.constant 0 : index
    %107 = vector.load %arg11[%c0_55, %c0_56] : memref<8x1xf32, #tpu.memory_space<vmem>>, vector<8x1xf32>
    %108 = vector.broadcast %107 : vector<8x1xf32> to vector<8x16xf32>
    %109 = arith.addf %106, %108 : vector<8x16xf32>
    %cst_57 = arith.constant 0.000000e+00 : f32
    %110 = vector.broadcast %cst_57 : f32 to vector<8x16xf32>
    %111 = arith.maximumf %109, %110 : vector<8x16xf32>
    %c0_58 = arith.constant 0 : index
    %c0_59 = arith.constant 0 : index
    %c0_60 = arith.constant 0 : index
    %112 = vector.load %arg12[%c0_58, %c0_59, %c0_60] : memref<1x32x16xf32, #tpu.memory_space<vmem>>, vector<1x8x16xf32>
    %113 = vector.shape_cast %112 : vector<1x8x16xf32> to vector<8x16xf32>
    %114 = vector.shape_cast %28 : vector<8x16xf32> to vector<1x8x16xf32>
    tpu.vector_store %arg12[%c0_58, %c0_59, %c0_60], %114 {strides = array<i32>} : memref<1x32x16xf32, #tpu.memory_space<vmem>>, vector<1x8x16xf32>,
    %c0_61 = arith.constant 0 : index
    %c8 = arith.constant 8 : index
    %c0_62 = arith.constant 0 : index
    %115 = vector.load %arg12[%c0_61, %c8, %c0_62] : memref<1x32x16xf32, #tpu.memory_space<vmem>>, vector<1x8x16xf32>
    %116 = vector.shape_cast %115 : vector<1x8x16xf32> to vector<8x16xf32>
    %117 = vector.shape_cast %52 : vector<8x16xf32> to vector<1x8x16xf32>
    tpu.vector_store %arg12[%c0_61, %c8, %c0_62], %117 {strides = array<i32>} : memref<1x32x16xf32, #tpu.memory_space<vmem>>, vector<1x8x16xf32>,
    %c0_63 = arith.constant 0 : index
    %c16 = arith.constant 16 : index
    %c0_64 = arith.constant 0 : index
    %118 = vector.load %arg12[%c0_63, %c16, %c0_64] : memref<1x32x16xf32, #tpu.memory_space<vmem>>, vector<1x8x16xf32>
    %119 = vector.shape_cast %118 : vector<1x8x16xf32> to vector<8x16xf32>
    %120 = vector.shape_cast %84 : vector<8x16xf32> to vector<1x8x16xf32>
    tpu.vector_store %arg12[%c0_63, %c16, %c0_64], %120 {strides = array<i32>} : memref<1x32x16xf32, #tpu.memory_space<vmem>>, vector<1x8x16xf32>,
    %c0_65 = arith.constant 0 : index
    %c24 = arith.constant 24 : index
    %c0_66 = arith.constant 0 : index
    %121 = vector.load %arg12[%c0_65, %c24, %c0_66] : memref<1x32x16xf32, #tpu.memory_space<vmem>>, vector<1x8x16xf32>
    %122 = vector.shape_cast %121 : vector<1x8x16xf32> to vector<8x16xf32>
    %123 = vector.shape_cast %111 : vector<8x16xf32> to vector<1x8x16xf32>
    tpu.vector_store %arg12[%c0_65, %c24, %c0_66], %123 {strides = array<i32>} : memref<1x32x16xf32, #tpu.memory_space<vmem>>, vector<1x8x16xf32>,
    return
  }
  func.func @transform_0(%arg0: i32, %arg1: i32) -> (i32, i32, i32) {
    %c0_i32 = arith.constant 0 : i32
    %c0_i32_0 = arith.constant 0 : i32
    return %arg0, %c0_i32, %arg1 : i32, i32, i32
  }
  func.func @transform_1(%arg0: i32, %arg1: i32) -> (i32, i32, i32, i32) {
    %c0_i32 = arith.constant 0 : i32
    %c0_i32_0 = arith.constant 0 : i32
    %c0_i32_1 = arith.constant 0 : i32
    return %arg0, %arg1, %c0_i32, %c0_i32_0 : i32, i32, i32, i32
  }
  func.func @transform_2(%arg0: i32, %arg1: i32) -> (i32, i32) {
    %c0_i32 = arith.constant 0 : i32
    %c0_i32_0 = arith.constant 0 : i32
    %c0_i32_1 = arith.constant 0 : i32
    return %c0_i32, %c0_i32_0 : i32, i32
  }
  func.func @transform_3(%arg0: i32, %arg1: i32) -> (i32, i32) {
    %c0_i32 = arith.constant 0 : i32
    %c0_i32_0 = arith.constant 0 : i32
    %c0_i32_1 = arith.constant 0 : i32
    return %c0_i32, %c0_i32_0 : i32, i32
  }
  func.func @transform_4(%arg0: i32, %arg1: i32) -> (i32, i32, i32) {
    %c0_i32 = arith.constant 0 : i32
    %c0_i32_0 = arith.constant 0 : i32
    %c0_i32_1 = arith.constant 0 : i32
    %c0_i32_2 = arith.constant 0 : i32
    return %c0_i32, %c0_i32_0, %c0_i32_1 : i32, i32, i32
  }
  func.func @transform_5(%arg0: i32, %arg1: i32) -> (i32, i32) {
    %c0_i32 = arith.constant 0 : i32
    %c0_i32_0 = arith.constant 0 : i32
    %c0_i32_1 = arith.constant 0 : i32
    return %c0_i32, %c0_i32_0 : i32, i32
  }
  func.func @transform_6(%arg0: i32, %arg1: i32) -> (i32, i32, i32) {
    %c0_i32 = arith.constant 0 : i32
    %c0_i32_0 = arith.constant 0 : i32
    %c0_i32_1 = arith.constant 0 : i32
    %c0_i32_2 = arith.constant 0 : i32
    return %c0_i32, %c0_i32_0, %c0_i32_1 : i32, i32, i32
  }
  func.func @transform_7(%arg0: i32, %arg1: i32) -> (i32, i32) {
    %c0_i32 = arith.constant 0 : i32
    %c0_i32_0 = arith.constant 0 : i32
    %c0_i32_1 = arith.constant 0 : i32
    return %c0_i32, %c0_i32_0 : i32, i32
  }
  func.func @transform_8(%arg0: i32, %arg1: i32) -> (i32, i32) {
    %c0_i32 = arith.constant 0 : i32
    %c0_i32_0 = arith.constant 0 : i32
    %c0_i32_1 = arith.constant 0 : i32
    return %c0_i32, %c0_i32_0 : i32, i32
  }
  func.func @transform_9(%arg0: i32, %arg1: i32) -> (i32, i32) {
    %c0_i32 = arith.constant 0 : i32
    %c0_i32_0 = arith.constant 0 : i32
    %c0_i32_1 = arith.constant 0 : i32
    return %c0_i32, %c0_i32_0 : i32, i32
  }
  func.func @transform_10(%arg0: i32, %arg1: i32) -> (i32, i32, i32) {
    %c0_i32 = arith.constant 0 : i32
    %c0_i32_0 = arith.constant 0 : i32
    return %arg0, %c0_i32, %arg1 : i32, i32, i32
  }
}

</mosaic_0001>

<llo_original>
// kernel: tpu_custom_call.1
$region0: #{tpu_custom_call.1}
  #allocation0 [shape = 'u32[]', space=smem, size = 0x4, offset = 0x4, fixed_abs, tag = 'smem constant byte address 0x4 - core index']
  #allocation1 [shape = 'u32[144,128]{1,0:T(1,128)}', space=vmem, size = 0x12000, scoped, tag = 'internal scratch']
  %s0 = inlined_call_operand.vmem [shape: f32[2,4,16], index: 0, kind: input, shape index: {}]
  %s1 = inlined_call_operand.vmem [shape: f32[2,1,4,4], index: 1, kind: input, shape index: {}]
  %s2 = inlined_call_operand.vmem [shape: f32[16,4], index: 2, kind: input, shape index: {}]
  %s3 = inlined_call_operand.vmem [shape: f32[16,1], index: 3, kind: input, shape index: {}]
  %s4 = inlined_call_operand.vmem [shape: f32[3,8,4], index: 4, kind: input, shape index: {}]
  %s5 = inlined_call_operand.vmem [shape: f32[8,1], index: 5, kind: input, shape index: {}]
  %s6 = inlined_call_operand.vmem [shape: f32[5,8,4], index: 6, kind: input, shape index: {}]
  %s7 = inlined_call_operand.vmem [shape: f32[8,1], index: 7, kind: input, shape index: {}]
  %s8 = inlined_call_operand.vmem [shape: f32[8,4], index: 8, kind: input, shape index: {}]
  %s9 = inlined_call_operand.vmem [shape: f32[8,1], index: 9, kind: input, shape index: {}]
  %s10 = inlined_call_operand.vmem [shape: f32[2,32,16], index: 10, kind: output, shape index: {}]
  %s11 = sld [smem:[#allocation0]]
  $region73: #{tpu_custom_call.1} parent=0
    _
  %s13 = ssub.s32 1, %s11
  %s14 = scalar_select 0, %s13, %s11
  loop: start=0, step=1, limit=4
  $region2: #{tpu_custom_call.1} parent=0 // loop_pre_header
    _
  $region3: #{tpu_custom_call.1} parent=0 // loop_header
    %s16 = sphi 0, %s20
    %p17 = scmp.ge.s32.totalorder %s16, 4
    %s23 = sphi 0, %s35
    %s24 = sphi 0, %s31
    %s25 = sphi 0, %s23
    %s26 = sphi 0, %s24
    %s27 = sphi 0, %s25
    %s28 = sphi 0, %s26
    %s40 = sphi 0, %s42
    %s43 = sphi 0, %s40
    %s44 = sphi 0, %s43
    %s60 = sphi 0, %s44
    %s68 = sphi 0, %s70
    %s71 = sphi 0, %s68
    %s72 = sphi 0, %s71
    %s88 = sphi 0, %s72
    %s92 = sphi 0, %s92
    %s94 = sphi 0, %s92
    %s95 = sphi 0, %s94
    %s109 = sphi 0, %s95
    %s113 = sphi 0, %s113
    %s115 = sphi 0, %s113
    %s116 = sphi 0, %s115
    %s130 = sphi 0, %s116
    %s134 = sphi 0, %s134
    %s136 = sphi 0, %s134
    %s137 = sphi 0, %s136
    %s151 = sphi 0, %s137
    %s155 = sphi 0, %s155
    %s157 = sphi 0, %s155
    %s158 = sphi 0, %s157
    %s172 = sphi 0, %s158
    %s176 = sphi 0, %s176
    %s178 = sphi 0, %s176
    %s179 = sphi 0, %s178
    %s193 = sphi 0, %s179
    %s197 = sphi 0, %s197
    %s199 = sphi 0, %s197
    %s200 = sphi 0, %s199
    %s214 = sphi 0, %s200
    %s218 = sphi 0, %s218
    %s220 = sphi 0, %s218
    %s221 = sphi 0, %s220
    %s235 = sphi 0, %s221
    %s239 = sphi 0, %s239
    %s241 = sphi 0, %s239
    %s242 = sphi 0, %s241
    %s256 = sphi 0, %s242
    %s264 = sphi 0, %s266
    %s267 = sphi 0, %s264
    %s268 = sphi 0, %s267
    %s284 = sphi 0, %s268
  $region4: #{tpu_custom_call.1} parent=0 // loop_header_branch
    %19 = sbr.rel (%p17) target = $region8
  $region5: #{tpu_custom_call.1} parent=0 // loop_body
    %s21 = ssub.s32 %s16, 1
    %s22 = ssub.s32 %s16, 2
    %s29 = sadd.s32 1, %s24
    %p30 = scmp.ge.s32.totalorder %s29, 1
    %s31 = scalar_select %p30, 0, %s29
    %s32 = sadd.s32 1, %s23
    %s33 = scalar_select %p30, %s32, %s23
    %p34 = scmp.ge.s32.totalorder %s33, 2
    %s35 = scalar_select %p34, 0, %s33
    %s36 = ssub.s32 %s23, %s35
    %s37 = ssub.s32 %s24, %s31
    %s38 = sor.u32 %s36, %s37
    %p39 = scmp.eq.s32.totalorder %s38, 0
    %s41 = sadd.s32 %s40, 1
    %s42 = scalar_select %p39, %s40, %s41
    %p45 = pneg %p39
    %p46 = scmp.eq.s32.totalorder %s16, 1
    %p47 = por %p45, %p46
    %p48 = scmp.ne.s32.totalorder %s40, %s43
    %p49 = scmp.eq.s32.totalorder %s16, 0
    %p50 = por %p48, %p49
    %p51 = scmp.ne.s32.totalorder %s40, %s43
    %p52 = scmp.eq.s32.totalorder %s21, 1
    %p53 = por %p51, %p52
    %p54 = scmp.ne.s32.totalorder %s43, %s44
    %p55 = scmp.eq.s32.totalorder %s21, 0
    %p56 = por %p54, %p55
    %p57 = scmp.ne.s32.totalorder %s43, %s44
    %p58 = scmp.eq.s32.totalorder %s22, 1
    %p59 = por %p57, %p58
    %p61 = scmp.ne.s32.totalorder %s44, %s60
    %p62 = scmp.eq.s32.totalorder %s22, 0
    %p63 = por %p61, %p62
    %s64 = ssub.s32 %s23, %s35
    %s65 = ssub.s32 %s24, %s31
    %s66 = sor.u32 %s64, %s65
    %p67 = scmp.eq.s32.totalorder %s66, 0
    %s69 = sadd.s32 %s68, 1
    %s70 = scalar_select %p67, %s68, %s69
    %p73 = pneg %p67
    %p74 = scmp.eq.s32.totalorder %s16, 1
    %p75 = por %p73, %p74
    %p76 = scmp.ne.s32.totalorder %s68, %s71
    %p77 = scmp.eq.s32.totalorder %s16, 0
    %p78 = por %p76, %p77
    %p79 = scmp.ne.s32.totalorder %s68, %s71
    %p80 = scmp.eq.s32.totalorder %s21, 1
    %p81 = por %p79, %p80
    %p82 = scmp.ne.s32.totalorder %s71, %s72
    %p83 = scmp.eq.s32.totalorder %s21, 0
    %p84 = por %p82, %p83
    %p85 = scmp.ne.s32.totalorder %s71, %s72
    %p86 = scmp.eq.s32.totalorder %s22, 1
    %p87 = por %p85, %p86
    %p89 = scmp.ne.s32.totalorder %s72, %s88
    %p90 = scmp.eq.s32.totalorder %s22, 0
    %p91 = por %p89, %p90
    %s93 = sadd.s32 %s92, 1
    %p96 = scmp.eq.s32.totalorder %s16, 1
    %p97 = scmp.ne.s32.totalorder %s92, %s94
    %p98 = scmp.eq.s32.totalorder %s16, 0
    %p99 = por %p97, %p98
    %p100 = scmp.ne.s32.totalorder %s92, %s94
    %p101 = scmp.eq.s32.totalorder %s21, 1
    %p102 = por %p100, %p101
    %p103 = scmp.ne.s32.totalorder %s94, %s95
    %p104 = scmp.eq.s32.totalorder %s21, 0
    %p105 = por %p103, %p104
    %p106 = scmp.ne.s32.totalorder %s94, %s95
    %p107 = scmp.eq.s32.totalorder %s22, 1
    %p108 = por %p106, %p107
    %p110 = scmp.ne.s32.totalorder %s95, %s109
    %p111 = scmp.eq.s32.totalorder %s22, 0
    %p112 = por %p110, %p111
    %s114 = sadd.s32 %s113, 1
    %p117 = scmp.eq.s32.totalorder %s16, 1
    %p118 = scmp.ne.s32.totalorder %s113, %s115
    %p119 = scmp.eq.s32.totalorder %s16, 0
    %p120 = por %p118, %p119
    %p121 = scmp.ne.s32.totalorder %s113, %s115
    %p122 = scmp.eq.s32.totalorder %s21, 1
    %p123 = por %p121, %p122
    %p124 = scmp.ne.s32.totalorder %s115, %s116
    %p125 = scmp.eq.s32.totalorder %s21, 0
    %p126 = por %p124, %p125
    %p127 = scmp.ne.s32.totalorder %s115, %s116
    %p128 = scmp.eq.s32.totalorder %s22, 1
    %p129 = por %p127, %p128
    %p131 = scmp.ne.s32.totalorder %s116, %s130
    %p132 = scmp.eq.s32.totalorder %s22, 0
    %p133 = por %p131, %p132
    %s135 = sadd.s32 %s134, 1
    %p138 = scmp.eq.s32.totalorder %s16, 1
    %p139 = scmp.ne.s32.totalorder %s134, %s136
    %p140 = scmp.eq.s32.totalorder %s16, 0
    %p141 = por %p139, %p140
    %p142 = scmp.ne.s32.totalorder %s134, %s136
    %p143 = scmp.eq.s32.totalorder %s21, 1
    %p144 = por %p142, %p143
    %p145 = scmp.ne.s32.totalorder %s136, %s137
    %p146 = scmp.eq.s32.totalorder %s21, 0
    %p147 = por %p145, %p146
    %p148 = scmp.ne.s32.totalorder %s136, %s137
    %p149 = scmp.eq.s32.totalorder %s22, 1
    %p150 = por %p148, %p149
    %p152 = scmp.ne.s32.totalorder %s137, %s151
    %p153 = scmp.eq.s32.totalorder %s22, 0
    %p154 = por %p152, %p153
    %s156 = sadd.s32 %s155, 1
    %p159 = scmp.eq.s32.totalorder %s16, 1
    %p160 = scmp.ne.s32.totalorder %s155, %s157
    %p161 = scmp.eq.s32.totalorder %s16, 0
    %p162 = por %p160, %p161
    %p163 = scmp.ne.s32.totalorder %s155, %s157
    %p164 = scmp.eq.s32.totalorder %s21, 1
    %p165 = por %p163, %p164
    %p166 = scmp.ne.s32.totalorder %s157, %s158
    %p167 = scmp.eq.s32.totalorder %s21, 0
    %p168 = por %p166, %p167
    %p169 = scmp.ne.s32.totalorder %s157, %s158
    %p170 = scmp.eq.s32.totalorder %s22, 1
    %p171 = por %p169, %p170
    %p173 = scmp.ne.s32.totalorder %s158, %s172
    %p174 = scmp.eq.s32.totalorder %s22, 0
    %p175 = por %p173, %p174
    %s177 = sadd.s32 %s176, 1
    %p180 = scmp.eq.s32.totalorder %s16, 1
    %p181 = scmp.ne.s32.totalorder %s176, %s178
    %p182 = scmp.eq.s32.totalorder %s16, 0
    %p183 = por %p181, %p182
    %p184 = scmp.ne.s32.totalorder %s176, %s178
    %p185 = scmp.eq.s32.totalorder %s21, 1
    %p186 = por %p184, %p185
    %p187 = scmp.ne.s32.totalorder %s178, %s179
    %p188 = scmp.eq.s32.totalorder %s21, 0
    %p189 = por %p187, %p188
    %p190 = scmp.ne.s32.totalorder %s178, %s179
    %p191 = scmp.eq.s32.totalorder %s22, 1
    %p192 = por %p190, %p191
    %p194 = scmp.ne.s32.totalorder %s179, %s193
    %p195 = scmp.eq.s32.totalorder %s22, 0
    %p196 = por %p194, %p195
    %s198 = sadd.s32 %s197, 1
    %p201 = scmp.eq.s32.totalorder %s16, 1
    %p202 = scmp.ne.s32.totalorder %s197, %s199
    %p203 = scmp.eq.s32.totalorder %s16, 0
    %p204 = por %p202, %p203
    %p205 = scmp.ne.s32.totalorder %s197, %s199
    %p206 = scmp.eq.s32.totalorder %s21, 1
    %p207 = por %p205, %p206
    %p208 = scmp.ne.s32.totalorder %s199, %s200
    %p209 = scmp.eq.s32.totalorder %s21, 0
    %p210 = por %p208, %p209
    %p211 = scmp.ne.s32.totalorder %s199, %s200
    %p212 = scmp.eq.s32.totalorder %s22, 1
    %p213 = por %p211, %p212
    %p215 = scmp.ne.s32.totalorder %s200, %s214
    %p216 = scmp.eq.s32.totalorder %s22, 0
    %p217 = por %p215, %p216
    %s219 = sadd.s32 %s218, 1
    %p222 = scmp.eq.s32.totalorder %s16, 1
    %p223 = scmp.ne.s32.totalorder %s218, %s220
    %p224 = scmp.eq.s32.totalorder %s16, 0
    %p225 = por %p223, %p224
    %p226 = scmp.ne.s32.totalorder %s218, %s220
    %p227 = scmp.eq.s32.totalorder %s21, 1
    %p228 = por %p226, %p227
    %p229 = scmp.ne.s32.totalorder %s220, %s221
    %p230 = scmp.eq.s32.totalorder %s21, 0
    %p231 = por %p229, %p230
    %p232 = scmp.ne.s32.totalorder %s220, %s221
    %p233 = scmp.eq.s32.totalorder %s22, 1
    %p234 = por %p232, %p233
    %p236 = scmp.ne.s32.totalorder %s221, %s235
    %p237 = scmp.eq.s32.totalorder %s22, 0
    %p238 = por %p236, %p237
    %s240 = sadd.s32 %s239, 1
    %p243 = scmp.eq.s32.totalorder %s16, 1
    %p244 = scmp.ne.s32.totalorder %s239, %s241
    %p245 = scmp.eq.s32.totalorder %s16, 0
    %p246 = por %p244, %p245
    %p247 = scmp.ne.s32.totalorder %s239, %s241
    %p248 = scmp.eq.s32.totalorder %s21, 1
    %p249 = por %p247, %p248
    %p250 = scmp.ne.s32.totalorder %s241, %s242
    %p251 = scmp.eq.s32.totalorder %s21, 0
    %p252 = por %p250, %p251
    %p253 = scmp.ne.s32.totalorder %s241, %s242
    %p254 = scmp.eq.s32.totalorder %s22, 1
    %p255 = por %p253, %p254
    %p257 = scmp.ne.s32.totalorder %s242, %s256
    %p258 = scmp.eq.s32.totalorder %s22, 0
    %p259 = por %p257, %p258
    %s260 = ssub.s32 %s23, %s35
    %s261 = ssub.s32 %s24, %s31
    %s262 = sor.u32 %s260, %s261
    %p263 = scmp.eq.s32.totalorder %s262, 0
    %s265 = sadd.s32 %s264, 1
    %s266 = scalar_select %p263, %s264, %s265
    %p269 = pneg %p263
    %p270 = scmp.eq.s32.totalorder %s16, 1
    %p271 = por %p269, %p270
    %p272 = scmp.ne.s32.totalorder %s264, %s267
    %p273 = scmp.eq.s32.totalorder %s16, 0
    %p274 = por %p272, %p273
    %p275 = scmp.ne.s32.totalorder %s264, %s267
    %p276 = scmp.eq.s32.totalorder %s21, 1
    %p277 = por %p275, %p276
    %p278 = scmp.ne.s32.totalorder %s267, %s268
    %p279 = scmp.eq.s32.totalorder %s21, 0
    %p280 = por %p278, %p279
    %p281 = scmp.ne.s32.totalorder %s267, %s268
    %p282 = scmp.eq.s32.totalorder %s22, 1
    %p283 = por %p281, %p282
    %p285 = scmp.ne.s32.totalorder %s268, %s284
    %p286 = scmp.eq.s32.totalorder %s22, 0
    %p287 = por %p285, %p286
    %p288 = scmp.le.s32.totalorder 1, %s16
    %p289 = scmp.lt.s32.totalorder %s16, 3
    %p290 = pnand %p288, %p289
    %p291 = pneg %p290
    // Predicated region
    $region9: #{tpu_custom_call.1} parent=5 // pred_check
      _
    $region10: #{tpu_custom_call.1} parent=5 // pred_check_branch
      %293 = sbr.rel (%p290) target = $region12
    $region11: #{tpu_custom_call.1} parent=5 // pred_region
      %s294 = ssub.s32 %s16, 1
      // Predicated region
      $region13: #{tpu_custom_call.1} parent=11 // pred_check
        %p295 = pneg %p105
      $region14: #{tpu_custom_call.1} parent=11 // pred_check_branch
        %297 = sbr.rel (%p295) target = $region16
      $region15: #{tpu_custom_call.1} parent=11 // pred_region
        _
      $region16: #{tpu_custom_call.1} parent=11 // pred_fallthru
        _
      // Predicated region
      $region17: #{tpu_custom_call.1} parent=11 // pred_check
        %p298 = pneg %p126
      $region18: #{tpu_custom_call.1} parent=11 // pred_check_branch
        %300 = sbr.rel (%p298) target = $region20
      $region19: #{tpu_custom_call.1} parent=11 // pred_region
        _
      $region20: #{tpu_custom_call.1} parent=11 // pred_fallthru
        _
      // Predicated region
      $region21: #{tpu_custom_call.1} parent=11 // pred_check
        %p301 = pneg %p147
      $region22: #{tpu_custom_call.1} parent=11 // pred_check_branch
        %303 = sbr.rel (%p301) target = $region24
      $region23: #{tpu_custom_call.1} parent=11 // pred_region
        _
      $region24: #{tpu_custom_call.1} parent=11 // pred_fallthru
        _
      // Predicated region
      $region25: #{tpu_custom_call.1} parent=11 // pred_check
        %p304 = pneg %p168
      $region26: #{tpu_custom_call.1} parent=11 // pred_check_branch
        %306 = sbr.rel (%p304) target = $region28
      $region27: #{tpu_custom_call.1} parent=11 // pred_region
        _
      $region28: #{tpu_custom_call.1} parent=11 // pred_fallthru
        _
      // Predicated region
      $region29: #{tpu_custom_call.1} parent=11 // pred_check
        %p307 = pneg %p189
      $region30: #{tpu_custom_call.1} parent=11 // pred_check_branch
        %309 = sbr.rel (%p307) target = $region32
      $region31: #{tpu_custom_call.1} parent=11 // pred_region
        _
      $region32: #{tpu_custom_call.1} parent=11 // pred_fallthru
        _
      // Predicated region
      $region33: #{tpu_custom_call.1} parent=11 // pred_check
        %p310 = pneg %p210
      $region34: #{tpu_custom_call.1} parent=11 // pred_check_branch
        %312 = sbr.rel (%p310) target = $region36
      $region35: #{tpu_custom_call.1} parent=11 // pred_region
        _
      $region36: #{tpu_custom_call.1} parent=11 // pred_fallthru
        _
      // Predicated region
      $region37: #{tpu_custom_call.1} parent=11 // pred_check
        %p313 = pneg %p231
      $region38: #{tpu_custom_call.1} parent=11 // pred_check_branch
        %315 = sbr.rel (%p313) target = $region40
      $region39: #{tpu_custom_call.1} parent=11 // pred_region
        _
      $region40: #{tpu_custom_call.1} parent=11 // pred_fallthru
        _
      // Predicated region
      $region41: #{tpu_custom_call.1} parent=11 // pred_check
        %p316 = pneg %p252
      $region42: #{tpu_custom_call.1} parent=11 // pred_check_branch
        %318 = sbr.rel (%p316) target = $region44
      $region43: #{tpu_custom_call.1} parent=11 // pred_region
        _
      $region44: #{tpu_custom_call.1} parent=11 // pred_fallthru
        _
    $region12: #{tpu_custom_call.1} parent=5 // pred_fallthru
      _
    %p319 = scmp.lt.s32.totalorder %s16, 2
    // Predicated region
    $region45: #{tpu_custom_call.1} parent=5 // pred_check
      %p320 = pneg %p319
    $region46: #{tpu_custom_call.1} parent=5 // pred_check_branch
      %322 = sbr.rel (%p320) target = $region48
    $region47: #{tpu_custom_call.1} parent=5 // pred_region
      // Predicated region
      $region49: #{tpu_custom_call.1} parent=47 // pred_check
        %p323 = pneg %p50
      $region50: #{tpu_custom_call.1} parent=47 // pred_check_branch
        %325 = sbr.rel (%p323) target = $region52
      $region51: #{tpu_custom_call.1} parent=47 // pred_region
        %p326 = scmp.lt.s32.totalorder %s23, 1
        %s327 = scalar_select %p326, %s23, 1
        %p328 = scmp.lt.s32.totalorder %s24, 0
        %s329 = scalar_select %p328, %s24, 0
        %s330 = sadd.s32 %s329, %s327
        %s331 = smul.addr %s330, 4
        %s332 = scalar_lea.vmem %s0, %s331
      $region52: #{tpu_custom_call.1} parent=47 // pred_fallthru
        _
      // Predicated region
      $region53: #{tpu_custom_call.1} parent=47 // pred_check
        %p333 = pneg %p78
      $region54: #{tpu_custom_call.1} parent=47 // pred_check_branch
        %335 = sbr.rel (%p333) target = $region56
      $region55: #{tpu_custom_call.1} parent=47 // pred_region
        %p336 = scmp.lt.s32.totalorder %s23, 1
        %s337 = scalar_select %p336, %s23, 1
        %p338 = scmp.lt.s32.totalorder %s24, 0
        %s339 = scalar_select %p338, %s24, 0
        %s340 = sadd.s32 %s339, %s337
        %s341 = smul.addr %s340, 4
        %s342 = scalar_lea.vmem %s1, %s341
      $region56: #{tpu_custom_call.1} parent=47 // pred_fallthru
        _
    $region48: #{tpu_custom_call.1} parent=5 // pred_fallthru
      _
    %p343 = scmp.le.s32.totalorder 1, %s16
    %p344 = scmp.lt.s32.totalorder %s16, 3
    %p345 = pnand %p343, %p344
    %p346 = pneg %p345
    // Predicated region
    $region57: #{tpu_custom_call.1} parent=5 // pred_check
      _
    $region58: #{tpu_custom_call.1} parent=5 // pred_check_branch
      %348 = sbr.rel (%p345) target = $region60
    $region59: #{tpu_custom_call.1} parent=5 // pred_region
      %s349 = ssub.s32 %s16, 1
      %p350 = scmp.lt.s32.totalorder %s25, 1
      %s351 = scalar_select %p350, %s25, 1
      %p352 = scmp.lt.s32.totalorder %s26, 0
      %s353 = scalar_select %p352, %s26, 0
      %s354 = sadd.s32 %s353, %s351
      %s355 = smul.addr %s354, 4
      %s356 = scalar_lea.vmem %s0, %s355
      %p357 = pneg %p56
      %p358 = pneg %p53
      %p359 = scmp.lt.s32.totalorder %s25, 1
      %s360 = scalar_select %p359, %s25, 1
      %p361 = scmp.lt.s32.totalorder %s26, 0
      %s362 = scalar_select %p361, %s26, 0
      %s363 = sadd.s32 %s362, %s360
      %s364 = smul.addr %s363, 4
      %s365 = scalar_lea.vmem %s1, %s364
      %p366 = pneg %p84
      %p367 = pneg %p81
      %p368 = pneg %p105
      %p369 = pneg %p102
      %p370 = pneg %p126
      %p371 = pneg %p123
      %p372 = pneg %p147
      %p373 = pneg %p144
      %p374 = pneg %p168
      %p375 = pneg %p165
      %p376 = pneg %p189
      %p377 = pneg %p186
      %p378 = pneg %p210
      %p379 = pneg %p207
      %p380 = pneg %p231
      %p381 = pneg %p228
      %p382 = pneg %p252
      %p383 = pneg %p249
      %p384 = pneg %p280
      %p385 = pneg %p277
      %p386 = scmp.lt.s32.totalorder %s25, 1
      %s387 = scalar_select %p386, %s25, 1
      %p388 = scmp.lt.s32.totalorder %s26, 0
      %s389 = scalar_select %p388, %s26, 0
      %s390 = smul.addr %s387, 4
      %s391 = sadd.s32 %s389, %s390
      %s392 = smul.addr %s391, 8
      %s393 = scalar_lea.vmem %s10, %s392
      %p394 = scmp.lt.s32.totalorder %s25, 1
      %s395 = scalar_select %p394, %s25, 1
      %p396 = scmp.lt.s32.totalorder %s26, 0
      %s397 = scalar_select %p396, %s26, 0
      %s398 = sadd.s32 %s397, %s395
      %s399 = smul.addr %s398, 4
      %s400 = scalar_lea.vmem %s0, %s399
      %p401 = scmp.lt.s32.totalorder %s25, 1
      %s402 = scalar_select %p401, %s25, 1
      %p403 = scmp.lt.s32.totalorder %s26, 0
      %s404 = scalar_select %p403, %s26, 0
      %s405 = sadd.s32 %s404, %s402
      %s406 = smul.addr %s405, 4
      %s407 = scalar_lea.vmem %s1, %s406
      %p408 = scmp.lt.s32.totalorder %s25, 1
      %s409 = scalar_select %p408, %s25, 1
      %p410 = scmp.lt.s32.totalorder %s26, 0
      %s411 = scalar_select %p410, %s26, 0
      %s412 = smul.addr %s409, 4
      %s413 = sadd.s32 %s411, %s412
      %s414 = smul.addr %s413, 8
      %s415 = scalar_lea.vmem %s10, %s414
      %v416 = vld [vmem:[%s400] sm:$0xf]
      %v417 = vld [vmem:[%s407] sm:$0xf]
      %p418 = scmp.gt.s32.totalorder %s26, 0
      %s419 = scalar_select %p418, 1, 0
      %s420 = scvt.s32.f32 %s419
      %p421 = scmp.lt.s32.totalorder %s26, 0
      %s422 = scalar_select %p421, 1, 0
      %s423 = scvt.s32.f32 %s422
      %v424 = vld [vmem:[%s2] sm:$0xff]
      %v425 = vld [vmem:[%s2 + $0x8] sm:$0xff]
      %v426 = vld [vmem:[%s3] sm:$0xff]
      %v427 = vld [vmem:[%s3 + $0x8] sm:$0xff]
      %429 = vset.pattern.permute.xlu0 0
      %430 = vperm.xlu0 %429, %v426
      %v431 = vpop.permute.xlu0 %430
      %434 = vset.pattern.permute.xlu0 0
      %435 = vperm.xlu0 %434, %v427
      %v436 = vpop.permute.xlu0 %435
      %vm438 = vcmask 31744
      %v440 = vsel %vm438, %v424, 0
      %v443 = vsel %vm438, %v425, 0
      %vm445 = vcmask 1043456
      %v447 = vsel %vm445, %v416, 0
      %449 = vmatprep.subr.mxu0 0.0
      %450 = vmatpush1.msra.mxu0 %v447
      %451 = vmatprep.subr.mxu0 0.0
      %452 = vmatpush1.msra.mxu0 0.0
      %453 = vmatprep.subr.mxu0 0.0
      %454 = vmatpush1.msra.mxu0 0.0
      %455 = vmatprep.subr.mxu0 0.0
      %456 = vmatpush1.msra.mxu0 0.0
      %457 = vmatprep.subr.mxu0 0.0
      %458 = vmatpush1.msra.mxu0 0.0
      %459 = vmatprep.subr.mxu0 0.0
      %460 = vmatpush1.msra.mxu0 0.0
      %461 = vmatprep.subr.mxu0 0.0
      %462 = vmatpush1.msra.mxu0 0.0
      %463 = vmatprep.subr.mxu0 0.0
      %464 = vmatpush1.msra.mxu0 0.0
      %465 = vmatprep.subr.mxu0 0.0
      %466 = vmatpush1.msra.mxu0 0.0
      %467 = vmatprep.subr.mxu0 0.0
      %468 = vmatpush1.msra.mxu0 0.0
      %469 = vmatprep.subr.mxu0 0.0
      %470 = vmatpush1.msra.mxu0 0.0
      %471 = vmatprep.subr.mxu0 0.0
      %472 = vmatpush1.msra.mxu0 0.0
      %473 = vmatprep.subr.mxu0 0.0
      %474 = vmatpush1.msra.mxu0 0.0
      %475 = vmatprep.subr.mxu0 0.0
      %476 = vmatpush1.msra.mxu0 0.0
      %477 = vmatprep.subr.mxu0 0.0
      %478 = vmatpush1.msra.mxu0 0.0
      %479 = vmatprep.subr.mxu0 0.0
      %480 = vmatpush1.msra.mxu0 0.0
      %481 = vmatprep.subr.mxu0 0.0
      %482 = vmatpush1.msra.mxu0 0.0
      %483 = vmatprep.subr.mxu0 0.0
      %484 = vmatpush1.msra.mxu0 0.0
      %485 = vmatprep.subr.mxu0 0.0
      %486 = vmatpush1.msra.mxu0 0.0
      %487 = vmatprep.subr.mxu0 0.0
      %488 = vmatpush1.msra.mxu0 0.0
      %489 = vmatprep.subr.mxu0 0.0
      %490 = vmatpush1.msra.mxu0 0.0
      %491 = vmatprep.subr.mxu0 0.0
      %492 = vmatpush1.msra.mxu0 0.0
      %493 = vmatprep.subr.mxu0 0.0
      %494 = vmatpush1.msra.mxu0 0.0
      %495 = vmatprep.subr.mxu0 0.0
      %496 = vmatpush1.msra.mxu0 0.0
      %497 = vmatprep.subr.mxu0 0.0
      %498 = vmatpush1.msra.mxu0 0.0
      %499 = vmatprep.subr.mxu0 0.0
      %500 = vmatpush1.msra.mxu0 0.0
      %501 = vmatprep.subr.mxu0 0.0
      %502 = vmatpush1.msra.mxu0 0.0
      %503 = vmatprep.subr.mxu0 0.0
      %504 = vmatpush1.msra.mxu0 0.0
      %505 = vmatprep.subr.mxu0 0.0
      %506 = vmatpush1.msra.mxu0 0.0
      %507 = vmatprep.subr.mxu0 0.0
      %508 = vmatpush1.msra.mxu0 0.0
      %509 = vmatprep.subr.mxu0 0.0
      %510 = vmatpush1.msra.mxu0 0.0
      %511 = vmatprep.subr.mxu0 0.0
      %512 = vmatpush1.msra.mxu0 0.0
      %513 = vmatprep.mubr.f32.mxu0 0.0
      %514 = vmatmul.mubr.f32.gmra.mrb[0].mxu0 %v440
      %v515 = vpop.f32.mrb[0].mxu0
      %v516 = vadd.f32 %v431, %v515
      %v517 = vpop.f32.mrb[0].mxu0
      %518 = vmatprep.mubr.f32.mxu0 0.0
      %519 = vmatmul.mubr.f32.gmra.mrb[0].mxu0 %v443
      %v520 = vpop.f32.mrb[0].mxu0
      %v521 = vadd.f32 %v436, %v520
      %v522 = vpop.f32.mrb[0].mxu0
      %523 = vdwg.mxu0
      %v524 = vmax.f32 %v516, 0.0
      %v525 = vmax.f32 %v521, 0.0
      %v527 = vsel %vm445, %v417, 0
      %529 = vmatprep.subr.mxu0 0.0
      %530 = vmatpush1.msra.mxu0 %v527
      %531 = vmatprep.subr.mxu0 0.0
      %532 = vmatpush1.msra.mxu0 0.0
      %533 = vmatprep.subr.mxu0 0.0
      %534 = vmatpush1.msra.mxu0 0.0
      %535 = vmatprep.subr.mxu0 0.0
      %536 = vmatpush1.msra.mxu0 0.0
      %537 = vmatprep.subr.mxu0 0.0
      %538 = vmatpush1.msra.mxu0 0.0
      %539 = vmatprep.subr.mxu0 0.0
      %540 = vmatpush1.msra.mxu0 0.0
      %541 = vmatprep.subr.mxu0 0.0
      %542 = vmatpush1.msra.mxu0 0.0
      %543 = vmatprep.subr.mxu0 0.0
      %544 = vmatpush1.msra.mxu0 0.0
      %545 = vmatprep.subr.mxu0 0.0
      %546 = vmatpush1.msra.mxu0 0.0
      %547 = vmatprep.subr.mxu0 0.0
      %548 = vmatpush1.msra.mxu0 0.0
      %549 = vmatprep.subr.mxu0 0.0
      %550 = vmatpush1.msra.mxu0 0.0
      %551 = vmatprep.subr.mxu0 0.0
      %552 = vmatpush1.msra.mxu0 0.0
      %553 = vmatprep.subr.mxu0 0.0
      %554 = vmatpush1.msra.mxu0 0.0
      %555 = vmatprep.subr.mxu0 0.0
      %556 = vmatpush1.msra.mxu0 0.0
      %557 = vmatprep.subr.mxu0 0.0
      %558 = vmatpush1.msra.mxu0 0.0
      %559 = vmatprep.subr.mxu0 0.0
      %560 = vmatpush1.msra.mxu0 0.0
      %561 = vmatprep.subr.mxu0 0.0
      %562 = vmatpush1.msra.mxu0 0.0
      %563 = vmatprep.subr.mxu0 0.0
      %564 = vmatpush1.msra.mxu0 0.0
      %565 = vmatprep.subr.mxu0 0.0
      %566 = vmatpush1.msra.mxu0 0.0
      %567 = vmatprep.subr.mxu0 0.0
      %568 = vmatpush1.msra.mxu0 0.0
      %569 = vmatprep.subr.mxu0 0.0
      %570 = vmatpush1.msra.mxu0 0.0
      %571 = vmatprep.subr.mxu0 0.0
      %572 = vmatpush1.msra.mxu0 0.0
      %573 = vmatprep.subr.mxu0 0.0
      %574 = vmatpush1.msra.mxu0 0.0
      %575 = vmatprep.subr.mxu0 0.0
      %576 = vmatpush1.msra.mxu0 0.0
      %577 = vmatprep.subr.mxu0 0.0
      %578 = vmatpush1.msra.mxu0 0.0
      %579 = vmatprep.subr.mxu0 0.0
      %580 = vmatpush1.msra.mxu0 0.0
      %581 = vmatprep.subr.mxu0 0.0
      %582 = vmatpush1.msra.mxu0 0.0
      %583 = vmatprep.subr.mxu0 0.0
      %584 = vmatpush1.msra.mxu0 0.0
      %585 = vmatprep.subr.mxu0 0.0
      %586 = vmatpush1.msra.mxu0 0.0
      %587 = vmatprep.subr.mxu0 0.0
      %588 = vmatpush1.msra.mxu0 0.0
      %589 = vmatprep.subr.mxu0 0.0
      %590 = vmatpush1.msra.mxu0 0.0
      %591 = vmatprep.subr.mxu0 0.0
      %592 = vmatpush1.msra.mxu0 0.0
      %593 = vmatprep.mubr.f32.mxu0 0.0
      %594 = vmatmul.mubr.f32.gmra.mrb[0].mxu0 %v440
      %v595 = vpop.f32.mrb[0].mxu0
      %v596 = vpop.f32.mrb[0].mxu0
      %597 = vmatprep.mubr.f32.mxu0 0.0
      %598 = vmatmul.mubr.f32.gmra.mrb[0].mxu0 %v443
      %v599 = vpop.f32.mrb[0].mxu0
      %v600 = vadd.f32 %v436, %v599
      %v601 = vpop.f32.mrb[0].mxu0
      %602 = vdwg.mxu0
      %v603 = vmax.f32 %v600, 0.0
      %v604 = vstv %s420
      %v605 = vmul.f32 %v603, %v604
      %v606 = vstv %s423
      %v607 = vmul.f32 %v603, %v606
      %609 = vrot.lane.b32.xlu0 %v605, 127
      %v610 = vpop.permute.xlu0 %609
      %613 = vrot.lane.b32.xlu0 %v525, 1
      %v614 = vpop.permute.xlu0 %613
      %617 = vrot.lane.b32.xlu0 %v607, 15
      %v618 = vpop.permute.xlu0 %617
      %vm620 = vcmask 7168
      %v621 = vsel %vm620, %v610, %v614
      %vm622 = vcmask 138240
      %v623 = vsel %vm622, %v621, %v618
      %v624 = vld [vmem:[%s4] sm:$0xff]
      %s625 = scalar_lea.vmem %s4, 8
      %v626 = vld [vmem:[%s625] sm:$0xff]
      %628 = vrot.lane.b32.xlu0 %v623, 127
      %v629 = vpop.permute.xlu0 %628
      %v631 = vsel %vm438, %v626, 0
      %v633 = vsel %vm445, %v629, 0
      %635 = vmatprep.subr.mxu0 0.0
      %636 = vmatpush1.msra.mxu0 %v633
      %637 = vmatprep.subr.mxu0 0.0
      %638 = vmatpush1.msra.mxu0 0.0
      %639 = vmatprep.subr.mxu0 0.0
      %640 = vmatpush1.msra.mxu0 0.0
      %641 = vmatprep.subr.mxu0 0.0
      %642 = vmatpush1.msra.mxu0 0.0
      %643 = vmatprep.subr.mxu0 0.0
      %644 = vmatpush1.msra.mxu0 0.0
      %645 = vmatprep.subr.mxu0 0.0
      %646 = vmatpush1.msra.mxu0 0.0
      %647 = vmatprep.subr.mxu0 0.0
      %648 = vmatpush1.msra.mxu0 0.0
      %649 = vmatprep.subr.mxu0 0.0
      %650 = vmatpush1.msra.mxu0 0.0
      %651 = vmatprep.subr.mxu0 0.0
      %652 = vmatpush1.msra.mxu0 0.0
      %653 = vmatprep.subr.mxu0 0.0
      %654 = vmatpush1.msra.mxu0 0.0
      %655 = vmatprep.subr.mxu0 0.0
      %656 = vmatpush1.msra.mxu0 0.0
      %657 = vmatprep.subr.mxu0 0.0
      %658 = vmatpush1.msra.mxu0 0.0
      %659 = vmatprep.subr.mxu0 0.0
      %660 = vmatpush1.msra.mxu0 0.0
      %661 = vmatprep.subr.mxu0 0.0
      %662 = vmatpush1.msra.mxu0 0.0
      %663 = vmatprep.subr.mxu0 0.0
      %664 = vmatpush1.msra.mxu0 0.0
      %665 = vmatprep.subr.mxu0 0.0
      %666 = vmatpush1.msra.mxu0 0.0
      %667 = vmatprep.subr.mxu0 0.0
      %668 = vmatpush1.msra.mxu0 0.0
      %669 = vmatprep.subr.mxu0 0.0
      %670 = vmatpush1.msra.mxu0 0.0
      %671 = vmatprep.subr.mxu0 0.0
      %672 = vmatpush1.msra.mxu0 0.0
      %673 = vmatprep.subr.mxu0 0.0
      %674 = vmatpush1.msra.mxu0 0.0
      %675 = vmatprep.subr.mxu0 0.0
      %676 = vmatpush1.msra.mxu0 0.0
      %677 = vmatprep.subr.mxu0 0.0
      %678 = vmatpush1.msra.mxu0 0.0
      %679 = vmatprep.subr.mxu0 0.0
      %680 = vmatpush1.msra.mxu0 0.0
      %681 = vmatprep.subr.mxu0 0.0
      %682 = vmatpush1.msra.mxu0 0.0
      %683 = vmatprep.subr.mxu0 0.0
      %684 = vmatpush1.msra.mxu0 0.0
      %685 = vmatprep.subr.mxu0 0.0
      %686 = vmatpush1.msra.mxu0 0.0
      %687 = vmatprep.subr.mxu0 0.0
      %688 = vmatpush1.msra.mxu0 0.0
      %689 = vmatprep.subr.mxu0 0.0
      %690 = vmatpush1.msra.mxu0 0.0
      %691 = vmatprep.subr.mxu0 0.0
      %692 = vmatpush1.msra.mxu0 0.0
      %693 = vmatprep.subr.mxu0 0.0
      %694 = vmatpush1.msra.mxu0 0.0
      %695 = vmatprep.subr.mxu0 0.0
      %696 = vmatpush1.msra.mxu0 0.0
      %697 = vmatprep.subr.mxu0 0.0
      %698 = vmatpush1.msra.mxu0 0.0
      %699 = vmatprep.mubr.f32.mxu0 0.0
      %700 = vmatmul.mubr.f32.gmra.mrb[0].mxu0 %v631
      %v701 = vpop.f32.mrb[0].mxu0
      %v702 = vadd.f32 0.0, %v701
      %v703 = vpop.f32.mrb[0].mxu0
      %704 = vdwg.mxu0
      %v706 = vsel %vm438, %v624, 0
      %v708 = vsel %vm445, %v623, 0
      %710 = vmatprep.subr.mxu0 0.0
      %711 = vmatpush1.msra.mxu0 %v708
      %712 = vmatprep.subr.mxu0 0.0
      %713 = vmatpush1.msra.mxu0 0.0
      %714 = vmatprep.subr.mxu0 0.0
      %715 = vmatpush1.msra.mxu0 0.0
      %716 = vmatprep.subr.mxu0 0.0
      %717 = vmatpush1.msra.mxu0 0.0
      %718 = vmatprep.subr.mxu0 0.0
      %719 = vmatpush1.msra.mxu0 0.0
      %720 = vmatprep.subr.mxu0 0.0
      %721 = vmatpush1.msra.mxu0 0.0
      %722 = vmatprep.subr.mxu0 0.0
      %723 = vmatpush1.msra.mxu0 0.0
      %724 = vmatprep.subr.mxu0 0.0
      %725 = vmatpush1.msra.mxu0 0.0
      %726 = vmatprep.subr.mxu0 0.0
      %727 = vmatpush1.msra.mxu0 0.0
      %728 = vmatprep.subr.mxu0 0.0
      %729 = vmatpush1.msra.mxu0 0.0
      %730 = vmatprep.subr.mxu0 0.0
      %731 = vmatpush1.msra.mxu0 0.0
      %732 = vmatprep.subr.mxu0 0.0
      %733 = vmatpush1.msra.mxu0 0.0
      %734 = vmatprep.subr.mxu0 0.0
      %735 = vmatpush1.msra.mxu0 0.0
      %736 = vmatprep.subr.mxu0 0.0
      %737 = vmatpush1.msra.mxu0 0.0
      %738 = vmatprep.subr.mxu0 0.0
      %739 = vmatpush1.msra.mxu0 0.0
      %740 = vmatprep.subr.mxu0 0.0
      %741 = vmatpush1.msra.mxu0 0.0
      %742 = vmatprep.subr.mxu0 0.0
      %743 = vmatpush1.msra.mxu0 0.0
      %744 = vmatprep.subr.mxu0 0.0
      %745 = vmatpush1.msra.mxu0 0.0
      %746 = vmatprep.subr.mxu0 0.0
      %747 = vmatpush1.msra.mxu0 0.0
      %748 = vmatprep.subr.mxu0 0.0
      %749 = vmatpush1.msra.mxu0 0.0
      %750 = vmatprep.subr.mxu0 0.0
      %751 = vmatpush1.msra.mxu0 0.0
      %752 = vmatprep.subr.mxu0 0.0
      %753 = vmatpush1.msra.mxu0 0.0
      %754 = vmatprep.subr.mxu0 0.0
      %755 = vmatpush1.msra.mxu0 0.0
      %756 = vmatprep.subr.mxu0 0.0
      %757 = vmatpush1.msra.mxu0 0.0
      %758 = vmatprep.subr.mxu0 0.0
      %759 = vmatpush1.msra.mxu0 0.0
      %760 = vmatprep.subr.mxu0 0.0
      %761 = vmatpush1.msra.mxu0 0.0
      %762 = vmatprep.subr.mxu0 0.0
      %763 = vmatpush1.msra.mxu0 0.0
      %764 = vmatprep.subr.mxu0 0.0
      %765 = vmatpush1.msra.mxu0 0.0
      %766 = vmatprep.subr.mxu0 0.0
      %767 = vmatpush1.msra.mxu0 0.0
      %768 = vmatprep.subr.mxu0 0.0
      %769 = vmatpush1.msra.mxu0 0.0
      %770 = vmatprep.subr.mxu0 0.0
      %771 = vmatpush1.msra.mxu0 0.0
      %772 = vmatprep.subr.mxu0 0.0
      %773 = vmatpush1.msra.mxu0 0.0
      %774 = vmatprep.mubr.f32.mxu0 0.0
      %775 = vmatmul.mubr.f32.gmra.mrb[0].mxu0 %v706
      %v776 = vpop.f32.mrb[0].mxu0
      %v777 = vadd.f32 %v702, %v776
      %v778 = vpop.f32.mrb[0].mxu0
      %779 = vdwg.mxu0
      %s780 = scalar_lea.vmem %s4, 16
      %v781 = vld [vmem:[%s780] sm:$0xff]
      %782 = vrot.lane.b32.xlu0 %v623, 126
      %v783 = vpop.permute.xlu0 %782
      %v785 = vsel %vm438, %v781, 0
      %v787 = vsel %vm445, %v783, 0
      %789 = vmatprep.subr.mxu0 0.0
      %790 = vmatpush1.msra.mxu0 %v787
      %791 = vmatprep.subr.mxu0 0.0
      %792 = vmatpush1.msra.mxu0 0.0
      %793 = vmatprep.subr.mxu0 0.0
      %794 = vmatpush1.msra.mxu0 0.0
      %795 = vmatprep.subr.mxu0 0.0
      %796 = vmatpush1.msra.mxu0 0.0
      %797 = vmatprep.subr.mxu0 0.0
      %798 = vmatpush1.msra.mxu0 0.0
      %799 = vmatprep.subr.mxu0 0.0
      %800 = vmatpush1.msra.mxu0 0.0
      %801 = vmatprep.subr.mxu0 0.0
      %802 = vmatpush1.msra.mxu0 0.0
      %803 = vmatprep.subr.mxu0 0.0
      %804 = vmatpush1.msra.mxu0 0.0
      %805 = vmatprep.subr.mxu0 0.0
      %806 = vmatpush1.msra.mxu0 0.0
      %807 = vmatprep.subr.mxu0 0.0
      %808 = vmatpush1.msra.mxu0 0.0
      %809 = vmatprep.subr.mxu0 0.0
      %810 = vmatpush1.msra.mxu0 0.0
      %811 = vmatprep.subr.mxu0 0.0
      %812 = vmatpush1.msra.mxu0 0.0
      %813 = vmatprep.subr.mxu0 0.0
      %814 = vmatpush1.msra.mxu0 0.0
      %815 = vmatprep.subr.mxu0 0.0
      %816 = vmatpush1.msra.mxu0 0.0
      %817 = vmatprep.subr.mxu0 0.0
      %818 = vmatpush1.msra.mxu0 0.0
      %819 = vmatprep.subr.mxu0 0.0
      %820 = vmatpush1.msra.mxu0 0.0
      %821 = vmatprep.subr.mxu0 0.0
      %822 = vmatpush1.msra.mxu0 0.0
      %823 = vmatprep.subr.mxu0 0.0
      %824 = vmatpush1.msra.mxu0 0.0
      %825 = vmatprep.subr.mxu0 0.0
      %826 = vmatpush1.msra.mxu0 0.0
      %827 = vmatprep.subr.mxu0 0.0
      %828 = vmatpush1.msra.mxu0 0.0
      %829 = vmatprep.subr.mxu0 0.0
      %830 = vmatpush1.msra.mxu0 0.0
      %831 = vmatprep.subr.mxu0 0.0
      %832 = vmatpush1.msra.mxu0 0.0
      %833 = vmatprep.subr.mxu0 0.0
      %834 = vmatpush1.msra.mxu0 0.0
      %835 = vmatprep.subr.mxu0 0.0
      %836 = vmatpush1.msra.mxu0 0.0
      %837 = vmatprep.subr.mxu0 0.0
      %838 = vmatpush1.msra.mxu0 0.0
      %839 = vmatprep.subr.mxu0 0.0
      %840 = vmatpush1.msra.mxu0 0.0
      %841 = vmatprep.subr.mxu0 0.0
      %842 = vmatpush1.msra.mxu0 0.0
      %843 = vmatprep.subr.mxu0 0.0
      %844 = vmatpush1.msra.mxu0 0.0
      %845 = vmatprep.subr.mxu0 0.0
      %846 = vmatpush1.msra.mxu0 0.0
      %847 = vmatprep.subr.mxu0 0.0
      %848 = vmatpush1.msra.mxu0 0.0
      %849 = vmatprep.subr.mxu0 0.0
      %850 = vmatpush1.msra.mxu0 0.0
      %851 = vmatprep.subr.mxu0 0.0
      %852 = vmatpush1.msra.mxu0 0.0
      %853 = vmatprep.mubr.f32.mxu0 0.0
      %854 = vmatmul.mubr.f32.gmra.mrb[0].mxu0 %v785
      %v855 = vpop.f32.mrb[0].mxu0
      %v856 = vadd.f32 0.0, %v855
      %v857 = vpop.f32.mrb[0].mxu0
      %858 = vdwg.mxu0
      %v859 = vadd.f32 %v777, %v856
      %v860 = vld [vmem:[%s5] sm:$0xff]
      %862 = vset.pattern.permute.xlu0 0
      %863 = vperm.xlu0 %862, %v860
      %v864 = vpop.permute.xlu0 %863
      %v866 = vadd.f32 %v859, %v864
      %v867 = vmax.f32 %v866, 0.0
      %868 = vrot.lane.b32.xlu0 %v525, 2
      %v869 = vpop.permute.xlu0 %868
      %871 = vrot.lane.b32.xlu0 %v607, 16
      %v872 = vpop.permute.xlu0 %871
      %vm874 = vcmask 15360
      %v875 = vsel %vm874, %v605, %v869
      %vm876 = vcmask 146432
      %v877 = vsel %vm876, %v875, %v872
      %v878 = vld [vmem:[%s6] sm:$0xff]
      %s879 = scalar_lea.vmem %s6, 8
      %v880 = vld [vmem:[%s879] sm:$0xff]
      %v882 = vrot.slane %v877, 4
      %883 = vrot.lane.b32.xlu0 %v882, 127
      %v884 = vpop.permute.xlu0 %883
      %v886 = vsel %vm438, %v880, 0
      %v888 = vsel %vm445, %v884, 0
      %890 = vmatprep.subr.mxu0 0.0
      %891 = vmatpush1.msra.mxu0 %v888
      %892 = vmatprep.subr.mxu0 0.0
      %893 = vmatpush1.msra.mxu0 0.0
      %894 = vmatprep.subr.mxu0 0.0
      %895 = vmatpush1.msra.mxu0 0.0
      %896 = vmatprep.subr.mxu0 0.0
      %897 = vmatpush1.msra.mxu0 0.0
      %898 = vmatprep.subr.mxu0 0.0
      %899 = vmatpush1.msra.mxu0 0.0
      %900 = vmatprep.subr.mxu0 0.0
      %901 = vmatpush1.msra.mxu0 0.0
      %902 = vmatprep.subr.mxu0 0.0
      %903 = vmatpush1.msra.mxu0 0.0
      %904 = vmatprep.subr.mxu0 0.0
      %905 = vmatpush1.msra.mxu0 0.0
      %906 = vmatprep.subr.mxu0 0.0
      %907 = vmatpush1.msra.mxu0 0.0
      %908 = vmatprep.subr.mxu0 0.0
      %909 = vmatpush1.msra.mxu0 0.0
      %910 = vmatprep.subr.mxu0 0.0
      %911 = vmatpush1.msra.mxu0 0.0
      %912 = vmatprep.subr.mxu0 0.0
      %913 = vmatpush1.msra.mxu0 0.0
      %914 = vmatprep.subr.mxu0 0.0
      %915 = vmatpush1.msra.mxu0 0.0
      %916 = vmatprep.subr.mxu0 0.0
      %917 = vmatpush1.msra.mxu0 0.0
      %918 = vmatprep.subr.mxu0 0.0
      %919 = vmatpush1.msra.mxu0 0.0
      %920 = vmatprep.subr.mxu0 0.0
      %921 = vmatpush1.msra.mxu0 0.0
      %922 = vmatprep.subr.mxu0 0.0
      %923 = vmatpush1.msra.mxu0 0.0
      %924 = vmatprep.subr.mxu0 0.0
      %925 = vmatpush1.msra.mxu0 0.0
      %926 = vmatprep.subr.mxu0 0.0
      %927 = vmatpush1.msra.mxu0 0.0
      %928 = vmatprep.subr.mxu0 0.0
      %929 = vmatpush1.msra.mxu0 0.0
      %930 = vmatprep.subr.mxu0 0.0
      %931 = vmatpush1.msra.mxu0 0.0
      %932 = vmatprep.subr.mxu0 0.0
      %933 = vmatpush1.msra.mxu0 0.0
      %934 = vmatprep.subr.mxu0 0.0
      %935 = vmatpush1.msra.mxu0 0.0
      %936 = vmatprep.subr.mxu0 0.0
      %937 = vmatpush1.msra.mxu0 0.0
      %938 = vmatprep.subr.mxu0 0.0
      %939 = vmatpush1.msra.mxu0 0.0
      %940 = vmatprep.subr.mxu0 0.0
      %941 = vmatpush1.msra.mxu0 0.0
      %942 = vmatprep.subr.mxu0 0.0
      %943 = vmatpush1.msra.mxu0 0.0
      %944 = vmatprep.subr.mxu0 0.0
      %945 = vmatpush1.msra.mxu0 0.0
      %946 = vmatprep.subr.mxu0 0.0
      %947 = vmatpush1.msra.mxu0 0.0
      %948 = vmatprep.subr.mxu0 0.0
      %949 = vmatpush1.msra.mxu0 0.0
      %950 = vmatprep.subr.mxu0 0.0
      %951 = vmatpush1.msra.mxu0 0.0
      %952 = vmatprep.subr.mxu0 0.0
      %953 = vmatpush1.msra.mxu0 0.0
      %954 = vmatprep.mubr.f32.mxu0 0.0
      %955 = vmatmul.mubr.f32.gmra.mrb[0].mxu0 %v886
      %v956 = vpop.f32.mrb[0].mxu0
      %v957 = vadd.f32 0.0, %v956
      %v958 = vpop.f32.mrb[0].mxu0
      %959 = vdwg.mxu0
      %v961 = vsel %vm438, %v878, 0
      %v963 = vsel %vm445, %v882, 0
      %965 = vmatprep.subr.mxu0 0.0
      %966 = vmatpush1.msra.mxu0 %v963
      %967 = vmatprep.subr.mxu0 0.0
      %968 = vmatpush1.msra.mxu0 0.0
      %969 = vmatprep.subr.mxu0 0.0
      %970 = vmatpush1.msra.mxu0 0.0
      %971 = vmatprep.subr.mxu0 0.0
      %972 = vmatpush1.msra.mxu0 0.0
      %973 = vmatprep.subr.mxu0 0.0
      %974 = vmatpush1.msra.mxu0 0.0
      %975 = vmatprep.subr.mxu0 0.0
      %976 = vmatpush1.msra.mxu0 0.0
      %977 = vmatprep.subr.mxu0 0.0
      %978 = vmatpush1.msra.mxu0 0.0
      %979 = vmatprep.subr.mxu0 0.0
      %980 = vmatpush1.msra.mxu0 0.0
      %981 = vmatprep.subr.mxu0 0.0
      %982 = vmatpush1.msra.mxu0 0.0
      %983 = vmatprep.subr.mxu0 0.0
      %984 = vmatpush1.msra.mxu0 0.0
      %985 = vmatprep.subr.mxu0 0.0
      %986 = vmatpush1.msra.mxu0 0.0
      %987 = vmatprep.subr.mxu0 0.0
      %988 = vmatpush1.msra.mxu0 0.0
      %989 = vmatprep.subr.mxu0 0.0
      %990 = vmatpush1.msra.mxu0 0.0
      %991 = vmatprep.subr.mxu0 0.0
      %992 = vmatpush1.msra.mxu0 0.0
      %993 = vmatprep.subr.mxu0 0.0
      %994 = vmatpush1.msra.mxu0 0.0
      %995 = vmatprep.subr.mxu0 0.0
      %996 = vmatpush1.msra.mxu0 0.0
      %997 = vmatprep.subr.mxu0 0.0
      %998 = vmatpush1.msra.mxu0 0.0
      %999 = vmatprep.subr.mxu0 0.0
      %1000 = vmatpush1.msra.mxu0 0.0
      %1001 = vmatprep.subr.mxu0 0.0
      %1002 = vmatpush1.msra.mxu0 0.0
      %1003 = vmatprep.subr.mxu0 0.0
      %1004 = vmatpush1.msra.mxu0 0.0
      %1005 = vmatprep.subr.mxu0 0.0
      %1006 = vmatpush1.msra.mxu0 0.0
      %1007 = vmatprep.subr.mxu0 0.0
      %1008 = vmatpush1.msra.mxu0 0.0
      %1009 = vmatprep.subr.mxu0 0.0
      %1010 = vmatpush1.msra.mxu0 0.0
      %1011 = vmatprep.subr.mxu0 0.0
      %1012 = vmatpush1.msra.mxu0 0.0
      %1013 = vmatprep.subr.mxu0 0.0
      %1014 = vmatpush1.msra.mxu0 0.0
      %1015 = vmatprep.subr.mxu0 0.0
      %1016 = vmatpush1.msra.mxu0 0.0
      %1017 = vmatprep.subr.mxu0 0.0
      %1018 = vmatpush1.msra.mxu0 0.0
      %1019 = vmatprep.subr.mxu0 0.0
      %1020 = vmatpush1.msra.mxu0 0.0
      %1021 = vmatprep.subr.mxu0 0.0
      %1022 = vmatpush1.msra.mxu0 0.0
      %1023 = vmatprep.subr.mxu0 0.0
      %1024 = vmatpush1.msra.mxu0 0.0
      %1025 = vmatprep.subr.mxu0 0.0
      %1026 = vmatpush1.msra.mxu0 0.0
      %1027 = vmatprep.subr.mxu0 0.0
      %1028 = vmatpush1.msra.mxu0 0.0
      %1029 = vmatprep.mubr.f32.mxu0 0.0
      %1030 = vmatmul.mubr.f32.gmra.mrb[0].mxu0 %v961
      %v1031 = vpop.f32.mrb[0].mxu0
      %v1032 = vadd.f32 %v957, %v1031
      %v1033 = vpop.f32.mrb[0].mxu0
      %1034 = vdwg.mxu0
      %s1035 = scalar_lea.vmem %s6, 16
      %v1036 = vld [vmem:[%s1035] sm:$0xff]
      %1037 = vrot.lane.b32.xlu0 %v882, 126
      %v1038 = vpop.permute.xlu0 %1037
      %v1040 = vsel %vm438, %v1036, 0
      %v1042 = vsel %vm445, %v1038, 0
      %1044 = vmatprep.subr.mxu0 0.0
      %1045 = vmatpush1.msra.mxu0 %v1042
      %1046 = vmatprep.subr.mxu0 0.0
      %1047 = vmatpush1.msra.mxu0 0.0
      %1048 = vmatprep.subr.mxu0 0.0
      %1049 = vmatpush1.msra.mxu0 0.0
      %1050 = vmatprep.subr.mxu0 0.0
      %1051 = vmatpush1.msra.mxu0 0.0
      %1052 = vmatprep.subr.mxu0 0.0
      %1053 = vmatpush1.msra.mxu0 0.0
      %1054 = vmatprep.subr.mxu0 0.0
      %1055 = vmatpush1.msra.mxu0 0.0
      %1056 = vmatprep.subr.mxu0 0.0
      %1057 = vmatpush1.msra.mxu0 0.0
      %1058 = vmatprep.subr.mxu0 0.0
      %1059 = vmatpush1.msra.mxu0 0.0
      %1060 = vmatprep.subr.mxu0 0.0
      %1061 = vmatpush1.msra.mxu0 0.0
      %1062 = vmatprep.subr.mxu0 0.0
      %1063 = vmatpush1.msra.mxu0 0.0
      %1064 = vmatprep.subr.mxu0 0.0
      %1065 = vmatpush1.msra.mxu0 0.0
      %1066 = vmatprep.subr.mxu0 0.0
      %1067 = vmatpush1.msra.mxu0 0.0
      %1068 = vmatprep.subr.mxu0 0.0
      %1069 = vmatpush1.msra.mxu0 0.0
      %1070 = vmatprep.subr.mxu0 0.0
      %1071 = vmatpush1.msra.mxu0 0.0
      %1072 = vmatprep.subr.mxu0 0.0
      %1073 = vmatpush1.msra.mxu0 0.0
      %1074 = vmatprep.subr.mxu0 0.0
      %1075 = vmatpush1.msra.mxu0 0.0
      %1076 = vmatprep.subr.mxu0 0.0
      %1077 = vmatpush1.msra.mxu0 0.0
      %1078 = vmatprep.subr.mxu0 0.0
      %1079 = vmatpush1.msra.mxu0 0.0
      %1080 = vmatprep.subr.mxu0 0.0
      %1081 = vmatpush1.msra.mxu0 0.0
      %1082 = vmatprep.subr.mxu0 0.0
      %1083 = vmatpush1.msra.mxu0 0.0
      %1084 = vmatprep.subr.mxu0 0.0
      %1085 = vmatpush1.msra.mxu0 0.0
      %1086 = vmatprep.subr.mxu0 0.0
      %1087 = vmatpush1.msra.mxu0 0.0
      %1088 = vmatprep.subr.mxu0 0.0
      %1089 = vmatpush1.msra.mxu0 0.0
      %1090 = vmatprep.subr.mxu0 0.0
      %1091 = vmatpush1.msra.mxu0 0.0
      %1092 = vmatprep.subr.mxu0 0.0
      %1093 = vmatpush1.msra.mxu0 0.0
      %1094 = vmatprep.subr.mxu0 0.0
      %1095 = vmatpush1.msra.mxu0 0.0
      %1096 = vmatprep.subr.mxu0 0.0
      %1097 = vmatpush1.msra.mxu0 0.0
      %1098 = vmatprep.subr.mxu0 0.0
      %1099 = vmatpush1.msra.mxu0 0.0
      %1100 = vmatprep.subr.mxu0 0.0
      %1101 = vmatpush1.msra.mxu0 0.0
      %1102 = vmatprep.subr.mxu0 0.0
      %1103 = vmatpush1.msra.mxu0 0.0
      %1104 = vmatprep.subr.mxu0 0.0
      %1105 = vmatpush1.msra.mxu0 0.0
      %1106 = vmatprep.subr.mxu0 0.0
      %1107 = vmatpush1.msra.mxu0 0.0
      %1108 = vmatprep.mubr.f32.mxu0 0.0
      %1109 = vmatmul.mubr.f32.gmra.mrb[0].mxu0 %v1040
      %v1110 = vpop.f32.mrb[0].mxu0
      %v1111 = vadd.f32 0.0, %v1110
      %v1112 = vpop.f32.mrb[0].mxu0
      %1113 = vdwg.mxu0
      %v1114 = vadd.f32 %v1032, %v1111
      %s1115 = scalar_lea.vmem %s6, 24
      %v1116 = vld [vmem:[%s1115] sm:$0xff]
      %1117 = vrot.lane.b32.xlu0 %v882, 125
      %v1118 = vpop.permute.xlu0 %1117
      %v1120 = vsel %vm438, %v1116, 0
      %v1122 = vsel %vm445, %v1118, 0
      %1124 = vmatprep.subr.mxu0 0.0
      %1125 = vmatpush1.msra.mxu0 %v1122
      %1126 = vmatprep.subr.mxu0 0.0
      %1127 = vmatpush1.msra.mxu0 0.0
      %1128 = vmatprep.subr.mxu0 0.0
      %1129 = vmatpush1.msra.mxu0 0.0
      %1130 = vmatprep.subr.mxu0 0.0
      %1131 = vmatpush1.msra.mxu0 0.0
      %1132 = vmatprep.subr.mxu0 0.0
      %1133 = vmatpush1.msra.mxu0 0.0
      %1134 = vmatprep.subr.mxu0 0.0
      %1135 = vmatpush1.msra.mxu0 0.0
      %1136 = vmatprep.subr.mxu0 0.0
      %1137 = vmatpush1.msra.mxu0 0.0
      %1138 = vmatprep.subr.mxu0 0.0
      %1139 = vmatpush1.msra.mxu0 0.0
      %1140 = vmatprep.subr.mxu0 0.0
      %1141 = vmatpush1.msra.mxu0 0.0
      %1142 = vmatprep.subr.mxu0 0.0
      %1143 = vmatpush1.msra.mxu0 0.0
      %1144 = vmatprep.subr.mxu0 0.0
      %1145 = vmatpush1.msra.mxu0 0.0
      %1146 = vmatprep.subr.mxu0 0.0
      %1147 = vmatpush1.msra.mxu0 0.0
      %1148 = vmatprep.subr.mxu0 0.0
      %1149 = vmatpush1.msra.mxu0 0.0
      %1150 = vmatprep.subr.mxu0 0.0
      %1151 = vmatpush1.msra.mxu0 0.0
      %1152 = vmatprep.subr.mxu0 0.0
      %1153 = vmatpush1.msra.mxu0 0.0
      %1154 = vmatprep.subr.mxu0 0.0
      %1155 = vmatpush1.msra.mxu0 0.0
      %1156 = vmatprep.subr.mxu0 0.0
      %1157 = vmatpush1.msra.mxu0 0.0
      %1158 = vmatprep.subr.mxu0 0.0
      %1159 = vmatpush1.msra.mxu0 0.0
      %1160 = vmatprep.subr.mxu0 0.0
      %1161 = vmatpush1.msra.mxu0 0.0
      %1162 = vmatprep.subr.mxu0 0.0
      %1163 = vmatpush1.msra.mxu0 0.0
      %1164 = vmatprep.subr.mxu0 0.0
      %1165 = vmatpush1.msra.mxu0 0.0
      %1166 = vmatprep.subr.mxu0 0.0
      %1167 = vmatpush1.msra.mxu0 0.0
      %1168 = vmatprep.subr.mxu0 0.0
      %1169 = vmatpush1.msra.mxu0 0.0
      %1170 = vmatprep.subr.mxu0 0.0
      %1171 = vmatpush1.msra.mxu0 0.0
      %1172 = vmatprep.subr.mxu0 0.0
      %1173 = vmatpush1.msra.mxu0 0.0
      %1174 = vmatprep.subr.mxu0 0.0
      %1175 = vmatpush1.msra.mxu0 0.0
      %1176 = vmatprep.subr.mxu0 0.0
      %1177 = vmatpush1.msra.mxu0 0.0
      %1178 = vmatprep.subr.mxu0 0.0
      %1179 = vmatpush1.msra.mxu0 0.0
      %1180 = vmatprep.subr.mxu0 0.0
      %1181 = vmatpush1.msra.mxu0 0.0
      %1182 = vmatprep.subr.mxu0 0.0
      %1183 = vmatpush1.msra.mxu0 0.0
      %1184 = vmatprep.subr.mxu0 0.0
      %1185 = vmatpush1.msra.mxu0 0.0
      %1186 = vmatprep.subr.mxu0 0.0
      %1187 = vmatpush1.msra.mxu0 0.0
      %1188 = vmatprep.mubr.f32.mxu0 0.0
      %1189 = vmatmul.mubr.f32.gmra.mrb[0].mxu0 %v1120
      %v1190 = vpop.f32.mrb[0].mxu0
      %v1191 = vadd.f32 0.0, %v1190
      %v1192 = vpop.f32.mrb[0].mxu0
      %1193 = vdwg.mxu0
      %v1194 = vadd.f32 %v1114, %v1191
      %s1195 = scalar_lea.vmem %s6, 32
      %v1196 = vld [vmem:[%s1195] sm:$0xff]
      %1197 = vrot.lane.b32.xlu0 %v882, 124
      %v1198 = vpop.permute.xlu0 %1197
      %v1200 = vsel %vm438, %v1196, 0
      %v1202 = vsel %vm445, %v1198, 0
      %1204 = vmatprep.subr.mxu0 0.0
      %1205 = vmatpush1.msra.mxu0 %v1202
      %1206 = vmatprep.subr.mxu0 0.0
      %1207 = vmatpush1.msra.mxu0 0.0
      %1208 = vmatprep.subr.mxu0 0.0
      %1209 = vmatpush1.msra.mxu0 0.0
      %1210 = vmatprep.subr.mxu0 0.0
      %1211 = vmatpush1.msra.mxu0 0.0
      %1212 = vmatprep.subr.mxu0 0.0
      %1213 = vmatpush1.msra.mxu0 0.0
      %1214 = vmatprep.subr.mxu0 0.0
      %1215 = vmatpush1.msra.mxu0 0.0
      %1216 = vmatprep.subr.mxu0 0.0
      %1217 = vmatpush1.msra.mxu0 0.0
      %1218 = vmatprep.subr.mxu0 0.0
      %1219 = vmatpush1.msra.mxu0 0.0
      %1220 = vmatprep.subr.mxu0 0.0
      %1221 = vmatpush1.msra.mxu0 0.0
      %1222 = vmatprep.subr.mxu0 0.0
      %1223 = vmatpush1.msra.mxu0 0.0
      %1224 = vmatprep.subr.mxu0 0.0
      %1225 = vmatpush1.msra.mxu0 0.0
      %1226 = vmatprep.subr.mxu0 0.0
      %1227 = vmatpush1.msra.mxu0 0.0
      %1228 = vmatprep.subr.mxu0 0.0
      %1229 = vmatpush1.msra.mxu0 0.0
      %1230 = vmatprep.subr.mxu0 0.0
      %1231 = vmatpush1.msra.mxu0 0.0
      %1232 = vmatprep.subr.mxu0 0.0
      %1233 = vmatpush1.msra.mxu0 0.0
      %1234 = vmatprep.subr.mxu0 0.0
      %1235 = vmatpush1.msra.mxu0 0.0
      %1236 = vmatprep.subr.mxu0 0.0
      %1237 = vmatpush1.msra.mxu0 0.0
      %1238 = vmatprep.subr.mxu0 0.0
      %1239 = vmatpush1.msra.mxu0 0.0
      %1240 = vmatprep.subr.mxu0 0.0
      %1241 = vmatpush1.msra.mxu0 0.0
      %1242 = vmatprep.subr.mxu0 0.0
      %1243 = vmatpush1.msra.mxu0 0.0
      %1244 = vmatprep.subr.mxu0 0.0
      %1245 = vmatpush1.msra.mxu0 0.0
      %1246 = vmatprep.subr.mxu0 0.0
      %1247 = vmatpush1.msra.mxu0 0.0
      %1248 = vmatprep.subr.mxu0 0.0
      %1249 = vmatpush1.msra.mxu0 0.0
      %1250 = vmatprep.subr.mxu0 0.0
      %1251 = vmatpush1.msra.mxu0 0.0
      %1252 = vmatprep.subr.mxu0 0.0
      %1253 = vmatpush1.msra.mxu0 0.0
      %1254 = vmatprep.subr.mxu0 0.0
      %1255 = vmatpush1.msra.mxu0 0.0
      %1256 = vmatprep.subr.mxu0 0.0
      %1257 = vmatpush1.msra.mxu0 0.0
      %1258 = vmatprep.subr.mxu0 0.0
      %1259 = vmatpush1.msra.mxu0 0.0
      %1260 = vmatprep.subr.mxu0 0.0
      %1261 = vmatpush1.msra.mxu0 0.0
      %1262 = vmatprep.subr.mxu0 0.0
      %1263 = vmatpush1.msra.mxu0 0.0
      %1264 = vmatprep.subr.mxu0 0.0
      %1265 = vmatpush1.msra.mxu0 0.0
      %1266 = vmatprep.subr.mxu0 0.0
      %1267 = vmatpush1.msra.mxu0 0.0
      %1268 = vmatprep.mubr.f32.mxu0 0.0
      %1269 = vmatmul.mubr.f32.gmra.mrb[0].mxu0 %v1200
      %v1270 = vpop.f32.mrb[0].mxu0
      %v1271 = vadd.f32 0.0, %v1270
      %v1272 = vpop.f32.mrb[0].mxu0
      %1273 = vdwg.mxu0
      %v1274 = vadd.f32 %v1194, %v1271
      %v1275 = vld [vmem:[%s7] sm:$0xff]
      %1277 = vset.pattern.permute.xlu0 0
      %1278 = vperm.xlu0 %1277, %v1275
      %v1279 = vpop.permute.xlu0 %1278
      %v1281 = vadd.f32 %v1274, %v1279
      %v1282 = vmax.f32 %v1281, 0.0
      %v1283 = vmul.f32 %v417, %v604
      %s1284 = ssub.f32 1.0, %s420
      %s1285 = smul.f32 %s1284, -3e+38
      %v1286 = vstv %s1285
      %v1287 = vadd.f32 %v1283, %v1286
      %v1288 = vmul.f32 %v417, %v606
      %s1289 = ssub.f32 1.0, %s423
      %s1290 = smul.f32 %s1289, -3e+38
      %v1291 = vstv %s1290
      %v1292 = vadd.f32 %v1288, %v1291
      %1294 = vrot.lane.b32.xlu0 %v1287, 127
      %v1295 = vpop.permute.xlu0 %1294
      %1297 = vrot.lane.b32.xlu0 %v416, 1
      %v1298 = vpop.permute.xlu0 %1297
      %1301 = vrot.lane.b32.xlu0 %v1292, 15
      %v1302 = vpop.permute.xlu0 %1301
      %v1304 = vsel %vm620, %v1295, %v1298
      %v1305 = vsel %vm622, %v1304, %v1302
      %1307 = vrot.lane.b32.xlu0 %v1305, 127
      %v1308 = vpop.permute.xlu0 %1307
      %v1310 = vmax.f32 %v1305, %v1308
      %1311 = vrot.lane.b32.xlu0 %v1305, 126
      %v1312 = vpop.permute.xlu0 %1311
      %v1314 = vmax.f32 %v1310, %v1312
      %v1315 = vld [vmem:[%s8] sm:$0xff]
      %v1316 = vld [vmem:[%s9] sm:$0xff]
      %1318 = vset.pattern.permute.xlu0 0
      %1319 = vperm.xlu0 %1318, %v1316
      %v1320 = vpop.permute.xlu0 %1319
      %v1323 = vsel %vm438, %v1315, 0
      %v1326 = vsel %vm445, %v1314, 0
      %1328 = vmatprep.subr.mxu0 0.0
      %1329 = vmatpush1.msra.mxu0 %v1326
      %1330 = vmatprep.subr.mxu0 0.0
      %1331 = vmatpush1.msra.mxu0 0.0
      %1332 = vmatprep.subr.mxu0 0.0
      %1333 = vmatpush1.msra.mxu0 0.0
      %1334 = vmatprep.subr.mxu0 0.0
      %1335 = vmatpush1.msra.mxu0 0.0
      %1336 = vmatprep.subr.mxu0 0.0
      %1337 = vmatpush1.msra.mxu0 0.0
      %1338 = vmatprep.subr.mxu0 0.0
      %1339 = vmatpush1.msra.mxu0 0.0
      %1340 = vmatprep.subr.mxu0 0.0
      %1341 = vmatpush1.msra.mxu0 0.0
      %1342 = vmatprep.subr.mxu0 0.0
      %1343 = vmatpush1.msra.mxu0 0.0
      %1344 = vmatprep.subr.mxu0 0.0
      %1345 = vmatpush1.msra.mxu0 0.0
      %1346 = vmatprep.subr.mxu0 0.0
      %1347 = vmatpush1.msra.mxu0 0.0
      %1348 = vmatprep.subr.mxu0 0.0
      %1349 = vmatpush1.msra.mxu0 0.0
      %1350 = vmatprep.subr.mxu0 0.0
      %1351 = vmatpush1.msra.mxu0 0.0
      %1352 = vmatprep.subr.mxu0 0.0
      %1353 = vmatpush1.msra.mxu0 0.0
      %1354 = vmatprep.subr.mxu0 0.0
      %1355 = vmatpush1.msra.mxu0 0.0
      %1356 = vmatprep.subr.mxu0 0.0
      %1357 = vmatpush1.msra.mxu0 0.0
      %1358 = vmatprep.subr.mxu0 0.0
      %1359 = vmatpush1.msra.mxu0 0.0
      %1360 = vmatprep.subr.mxu0 0.0
      %1361 = vmatpush1.msra.mxu0 0.0
      %1362 = vmatprep.subr.mxu0 0.0
      %1363 = vmatpush1.msra.mxu0 0.0
      %1364 = vmatprep.subr.mxu0 0.0
      %1365 = vmatpush1.msra.mxu0 0.0
      %1366 = vmatprep.subr.mxu0 0.0
      %1367 = vmatpush1.msra.mxu0 0.0
      %1368 = vmatprep.subr.mxu0 0.0
      %1369 = vmatpush1.msra.mxu0 0.0
      %1370 = vmatprep.subr.mxu0 0.0
      %1371 = vmatpush1.msra.mxu0 0.0
      %1372 = vmatprep.subr.mxu0 0.0
      %1373 = vmatpush1.msra.mxu0 0.0
      %1374 = vmatprep.subr.mxu0 0.0
      %1375 = vmatpush1.msra.mxu0 0.0
      %1376 = vmatprep.subr.mxu0 0.0
      %1377 = vmatpush1.msra.mxu0 0.0
      %1378 = vmatprep.subr.mxu0 0.0
      %1379 = vmatpush1.msra.mxu0 0.0
      %1380 = vmatprep.subr.mxu0 0.0
      %1381 = vmatpush1.msra.mxu0 0.0
      %1382 = vmatprep.subr.mxu0 0.0
      %1383 = vmatpush1.msra.mxu0 0.0
      %1384 = vmatprep.subr.mxu0 0.0
      %1385 = vmatpush1.msra.mxu0 0.0
      %1386 = vmatprep.subr.mxu0 0.0
      %1387 = vmatpush1.msra.mxu0 0.0
      %1388 = vmatprep.subr.mxu0 0.0
      %1389 = vmatpush1.msra.mxu0 0.0
      %1390 = vmatprep.subr.mxu0 0.0
      %1391 = vmatpush1.msra.mxu0 0.0
      %1392 = vmatprep.mubr.f32.mxu0 0.0
      %1393 = vmatmul.mubr.f32.gmra.mrb[0].mxu0 %v1323
      %v1394 = vpop.f32.mrb[0].mxu0
      %v1395 = vadd.f32 %v1320, %v1394
      %v1396 = vpop.f32.mrb[0].mxu0
      %1397 = vdwg.mxu0
      %v1398 = vmax.f32 %v1395, 0.0
      %vm1399 = vcmask 130048
      %1400 = vst.msk [vmem:[%s415] sm:$0xff] %vm1399, %v524
      %1401 = vst.msk [vmem:[%s415 + $0x8] sm:$0xff] %vm1399, %v867
      %1402 = vst.msk [vmem:[%s415 + $0x10] sm:$0xff] %vm1399, %v1282
      %1403 = vst.msk [vmem:[%s415 + $0x18] sm:$0xff] %vm1399, %v1398
      %p1404 = scmp.lt.s32.totalorder %s25, 1
      %s1405 = scalar_select %p1404, %s25, 1
      %p1406 = scmp.lt.s32.totalorder %s26, 0
      %s1407 = scalar_select %p1406, %s26, 0
      %s1408 = smul.addr %s1405, 4
      %s1409 = sadd.s32 %s1407, %s1408
      %s1410 = smul.addr %s1409, 8
      %s1411 = scalar_lea.vmem %s10, %s1410
      // Predicated region
      $region61: #{tpu_custom_call.1} parent=59 // pred_check
        %p1412 = pneg %p277
      $region62: #{tpu_custom_call.1} parent=59 // pred_check_branch
        %1414 = sbr.rel (%p1412) target = $region64
      $region63: #{tpu_custom_call.1} parent=59 // pred_region
        _
      $region64: #{tpu_custom_call.1} parent=59 // pred_fallthru
        _
    $region60: #{tpu_custom_call.1} parent=5 // pred_fallthru
      _
    %p1415 = scmp.le.s32.totalorder 2, %s16
    // Predicated region
    $region65: #{tpu_custom_call.1} parent=5 // pred_check
      %p1416 = pneg %p1415
    $region66: #{tpu_custom_call.1} parent=5 // pred_check_branch
      %1418 = sbr.rel (%p1416) target = $region68
    $region67: #{tpu_custom_call.1} parent=5 // pred_region
      %s1419 = ssub.s32 %s16, 2
      // Predicated region
      $region69: #{tpu_custom_call.1} parent=67 // pred_check
        %p1420 = pneg %p283
      $region70: #{tpu_custom_call.1} parent=67 // pred_check_branch
        %1422 = sbr.rel (%p1420) target = $region72
      $region71: #{tpu_custom_call.1} parent=67 // pred_region
        %p1423 = scmp.lt.s32.totalorder %s27, 1
        %s1424 = scalar_select %p1423, %s27, 1
        %p1425 = scmp.lt.s32.totalorder %s28, 0
        %s1426 = scalar_select %p1425, %s28, 0
        %s1427 = smul.addr %s1424, 4
        %s1428 = sadd.s32 %s1426, %s1427
        %s1429 = smul.addr %s1428, 8
        %s1430 = scalar_lea.vmem %s10, %s1429
      $region72: #{tpu_custom_call.1} parent=67 // pred_fallthru
        _
    $region68: #{tpu_custom_call.1} parent=5 // pred_fallthru
      _
  $region6: #{tpu_custom_call.1} parent=0 // loop_footer
    %s20 = sadd.s32 1, %s16
  $region7: #{tpu_custom_call.1} parent=0 // loop_footer_branch
    %15 = sbr.rel target = $region3
  $region8: #{tpu_custom_call.1} parent=0 // loop_exit
    _

</llo_original>
